<compile_context>
chip_gen: v6e
topology: v6e:2x2x1
jax: 0.10.0
libtpu: 0.0.40
codegen_flags: <defaults>
</compile_context>

<pallas_src>
import functools
import math

import jax
import jax.numpy as jnp
from jax import lax
from jax.experimental import pallas as pl
from jax.experimental.pallas import tpu as pltpu


def _layer_norm(x, w, b, eps=1e-5):
    mean = jnp.mean(x, axis=-1, keepdims=True)
    var = jnp.mean(jnp.square(x - mean), axis=-1, keepdims=True)
    return (x - mean) * lax.rsqrt(var + eps) * w + b


def _gelu_exact(x):
    # PyTorch nn.GELU() default (erf form)
    return 0.5 * x * (1.0 + lax.erf(x * (1.0 / math.sqrt(2.0))))


def transformer_layer_kernel(
    comb_ref,                       # (Bt, Lk, D)  bf16   Lk = Lc + Lt
    xt_ref,                         # (Bt, Lt, D)  f32    residual / query input
    wq_ref, bq_ref,                 # (D, D) bf16 (1/sqrt(dh) folded in), (1, D) f32
    wkv_ref, bkv_ref,               # (D, 2D) bf16, (1, 2D) f32
    wo_ref, bo_ref,                 # (D, D) bf16, (1, D) f32
    ln1_w_ref, ln1_b_ref,           # (1, D) f32
    w1_ref, b1_ref,                 # (D, F) bf16, (1, F) f32
    w2_ref, b2_ref,                 # (F, D) bf16, (1, D) f32
    ln2_w_ref, ln2_b_ref,           # (1, D) f32
    out_ref,                        # (Bt, Lt, D)
    *, num_heads,
):
    Bt, Lk, D = comb_ref.shape
    Lt = xt_ref.shape[1]
    H = num_heads
    dh = D // H

    comb = comb_ref[...]                              # (Bt, Lk, D) bf16
    x_t = xt_ref[...]                                 # (Bt, Lt, D) f32
    x_rows = x_t.reshape(Bt * Lt, D)                  # row-parallel view

    # ---- K/V projection: one packed full-lane matmul, f32 accumulation ----
    kv = jnp.dot(comb.reshape(Bt * Lk, D), wkv_ref[...],
                 preferred_element_type=jnp.float32) + bkv_ref[...]
    kv = kv.reshape(Bt, Lk, 2 * D)
    k = kv[:, :, :D]                                  # (Bt, Lk, D)
    v = kv[:, :, D:]                                  # (Bt, Lk, D)

    # ---- Q projection: only for x_t rows (scale already folded into weights) ----
    q = jnp.dot(x_rows.astype(jnp.bfloat16), wq_ref[...],
                preferred_element_type=jnp.float32) + bq_ref[...]
    q = q.reshape(Bt, Lt, D)

    # ---- attention: per-head (H is small & static), batched over Bt ----
    ctx_heads = []
    for h in range(H):
        lo, hi = h * dh, (h + 1) * dh
        q_h = q[:, :, lo:hi].astype(jnp.bfloat16)     # (Bt, Lt, dh)
        k_h = k[:, :, lo:hi].astype(jnp.bfloat16)     # (Bt, Lk, dh)
        v_h = v[:, :, lo:hi].astype(jnp.bfloat16)     # (Bt, Lk, dh)
        s = jnp.einsum("bqd,bkd->bqk", q_h, k_h,
                       preferred_element_type=jnp.float32)        # (Bt, Lt, Lk)
        s = s - jnp.max(s, axis=-1, keepdims=True)
        p = jnp.exp(s)
        # approx reciprocal uses the EUP slot; accurate enough for the 5e-2 contract.
        # Switch approx=False for tighter accuracy requirements.
        p = p * pl.reciprocal(jnp.sum(p, axis=-1, keepdims=True), approx=True)
        ctx_heads.append(jnp.einsum("bqk,bkd->bqd", p.astype(jnp.bfloat16), v_h,
                                    preferred_element_type=jnp.float32))
    ctx = jnp.concatenate(ctx_heads, axis=-1)         # (Bt, Lt, D) f32

    # ---- output projection: single matmul, full contraction depth K = D ----
    attn = jnp.dot(ctx.reshape(Bt * Lt, D).astype(jnp.bfloat16), wo_ref[...],
                   preferred_element_type=jnp.float32) + bo_ref[...]

    # ---- residual + LayerNorm 1 (f32) ----
    x = _layer_norm(x_rows + attn, ln1_w_ref[...], ln1_b_ref[...])

    # ---- feed-forward: Linear -> GELU(erf) -> Linear ----
    h1 = jnp.dot(x.astype(jnp.bfloat16), w1_ref[...],
                 preferred_element_type=jnp.float32) + b1_ref[...]
    h1 = _gelu_exact(h1)
    h2 = jnp.dot(h1.astype(jnp.bfloat16), w2_ref[...],
                 preferred_element_type=jnp.float32) + b2_ref[...]

    # ---- residual + LayerNorm 2 (f32) ----
    y = _layer_norm(x + h2, ln2_w_ref[...], ln2_b_ref[...])
    out_ref[...] = y.reshape(Bt, Lt, D).astype(out_ref.dtype)


def _pick_batch_block(B, Lt, target_rows=256):
    """Batch-block size: aim for ~256 matmul rows per grid step, keep >=2 steps (megacore)."""
    bt = max(1, min(B, max(1, target_rows // max(Lt, 1))))
    while B % bt:
        bt -= 1
    if B >= 2 and B // bt < 2:
        bt = max(1, B // 2)
        while B % bt:
            bt -= 1
    return bt


def custom_transformer_layer(x_t, x_cond, params, num_heads):
    """params: dict with PyTorch-layout weights (out, in) and 1-D biases."""
    B, Lt, D = x_t.shape
    _, Lc, _ = x_cond.shape
    Lk = Lc + Lt
    F = 4 * D
    H = num_heads
    dh = D // H
    scale = 1.0 / math.sqrt(dh)

    # Glue: concatenation along sequence axis (outside the kernel); bf16 K/V stream.
    combined = jnp.concatenate([x_cond, x_t], axis=1).astype(jnp.bfloat16)   # (B, Lk, D)
    x_t_in = x_t.astype(jnp.float32)                                         # (B, Lt, D)

    # --- packed weights, prepared once outside the kernel (torch layout is (out, in)) ---
    wq = (params["wq"].T * scale).astype(jnp.bfloat16)                        # (D, D)
    bq = (params["bq"] * scale).reshape(1, D).astype(jnp.float32)
    wkv = jnp.concatenate([params["wk"].T, params["wv"].T], axis=1).astype(jnp.bfloat16)  # (D, 2D)
    bkv = jnp.concatenate([params["bk"], params["bv"]]).reshape(1, 2 * D).astype(jnp.float32)
    wo = params["wo"].T.astype(jnp.bfloat16)                                  # (D, D)

    kparams = (
        wq, bq,
        wkv, bkv,
        wo, params["bo"].reshape(1, D).astype(jnp.float32),
        params["ln1_w"].reshape(1, D), params["ln1_b"].reshape(1, D),
        params["w1"].T.astype(jnp.bfloat16), params["b1"].reshape(1, F),
        params["w2"].T.astype(jnp.bfloat16), params["b2"].reshape(1, D),
        params["ln2_w"].reshape(1, D), params["ln2_b"].reshape(1, D),
    )

    Bt = _pick_batch_block(B, Lt)

    def rep_spec(shape):
        zeros = (0,) * len(shape)
        return pl.BlockSpec(shape, lambda b, _z=zeros: _z)   # constant index: VMEM-resident

    in_specs = [
        pl.BlockSpec((Bt, Lk, D), lambda b: (b, 0, 0)),      # combined (K/V stream)
        pl.BlockSpec((Bt, Lt, D), lambda b: (b, 0, 0)),      # x_t (query + residual)
    ] + [rep_spec(tuple(w.shape)) for w in kparams]

    # --- generation-aware VMEM budget ---
    weight_bytes = sum(int(w.size) * w.dtype.itemsize for w in kparams)
    block_bytes = Bt * Lk * D * 2 + Bt * Lt * D * 4 + Bt * Lt * D * jnp.dtype(x_t.dtype).itemsize
    work_bytes = 4 * (Bt * Lt * (F + 8 * D) + Bt * Lk * 2 * D + Bt * Lt * Lk)
    needed = 2 * weight_bytes + 2 * block_bytes + work_bytes + (4 << 20)
    try:
        cap = int(getattr(pltpu.get_tpu_info(), "vmem_capacity_bytes"))
    except Exception:
        cap = 64 * 1024 * 1024
    vmem_limit = int(min(max(needed, 32 * 1024 * 1024), cap * 3 // 4))

    kernel = functools.partial(transformer_layer_kernel, num_heads=H)
    return pl.pallas_call(
        kernel,
        out_shape=jax.ShapeDtypeStruct((B, Lt, D), x_t.dtype),
        grid_spec=pltpu.PrefetchScalarGridSpec(
            num_scalar_prefetch=0,
            grid=(B // Bt,),
            in_specs=in_specs,
            out_specs=pl.BlockSpec((Bt, Lt, D), lambda b: (b, 0, 0)),
        ),
        compiler_params=pltpu.CompilerParams(
            dimension_semantics=("parallel",),       # feeds both TCs on v7x when grid >= 2
            vmem_limit_bytes=vmem_limit,
        ),
    )(combined, x_t_in, *kparams)


def reference_layer(x_t, x_cond, params, num_heads):
    """Pure-JAX f32 reference mirroring torch.nn semantics (for validation)."""
    B, Lt, D = x_t.shape
    dh = D // num_heads
    comb = jnp.concatenate([x_cond, x_t], axis=1)
    Lk = comb.shape[1]

    q = x_t @ params["wq"].T + params["bq"]
    k = comb @ params["wk"].T + params["bk"]
    v = comb @ params["wv"].T + params["bv"]
    qh = q.reshape(B, Lt, num_heads, dh).transpose(0, 2, 1, 3)
    kh = k.reshape(B, Lk, num_heads, dh).transpose(0, 2, 1, 3)
    vh = v.reshape(B, Lk, num_heads, dh).transpose(0, 2, 1, 3)
    scores = jnp.einsum("bhqd,bhkd->bhqk", qh, kh) / math.sqrt(dh)
    p = jax.nn.softmax(scores, axis=-1)
    ctx = jnp.einsum("bhqk,bhkd->bhqd", p, vh).transpose(0, 2, 1, 3).reshape(B, Lt, D)
    attn = ctx @ params["wo"].T + params["bo"]

    x = _layer_norm(x_t + attn, params["ln1_w"], params["ln1_b"])
    h1 = jax.nn.gelu(x @ params["w1"].T + params["b1"], approximate=False)
    h2 = h1 @ params["w2"].T + params["b2"]
    return _layer_norm(x + h2, params["ln2_w"], params["ln2_b"])


def init_params(key, hidden_dim):
    D = hidden_dim
    F = 4 * D
    ks = jax.random.split(key, 8)
    s = 0.05
    in_proj_w = jax.random.normal(ks[0], (3 * D, D), jnp.float32) * s
    in_proj_b = jax.random.normal(ks[1], (3 * D,), jnp.float32) * s
    return {
        "wq": in_proj_w[:D], "wk": in_proj_w[D:2 * D], "wv": in_proj_w[2 * D:],
        "bq": in_proj_b[:D], "bk": in_proj_b[D:2 * D], "bv": in_proj_b[2 * D:],
        "wo": jax.random.normal(ks[2], (D, D), jnp.float32) * s,
        "bo": jax.random.normal(ks[3], (D,), jnp.float32) * s,
        "ln1_w": jnp.ones((D,), jnp.float32), "ln1_b": jnp.zeros((D,), jnp.float32),
        "w1": jax.random.normal(ks[4], (F, D), jnp.float32) * s,
        "b1": jax.random.normal(ks[5], (F,), jnp.float32) * s,
        "w2": jax.random.normal(ks[6], (D, F), jnp.float32) * s,
        "b2": jax.random.normal(ks[7], (D,), jnp.float32) * s,
        "ln2_w": jnp.ones((D,), jnp.float32), "ln2_b": jnp.zeros((D,), jnp.float32),
    }


if __name__ == "__main__":
    B, Lt, Lc, D, H = 2, 8, 4, 32, 4

    key = jax.random.PRNGKey(0)
    k_xt, k_xc, k_p = jax.random.split(key, 3)
    x_t = jax.random.normal(k_xt, (B, Lt, D), jnp.float32)
    x_cond = jax.random.normal(k_xc, (B, Lc, D), jnp.float32)
    params = init_params(k_p, D)

    out = custom_transformer_layer(x_t, x_cond, params, num_heads=H)
    out = jax.block_until_ready(out)

    ref = jax.block_until_ready(reference_layer(x_t, x_cond, params, num_heads=H))
    assert out.shape == (B, Lt, D)
    max_err = float(jnp.max(jnp.abs(out - ref)))
    # bf16 MXU operands + approx reciprocal => compare against f32 reference at loose tolerance.
    assert jnp.allclose(out, ref, rtol=5e-2, atol=5e-2), f"max abs err {max_err}"

    print("KERNEL_OK")
</pallas_src>

<mosaic_0001>
module attributes {stable_mosaic.version = 11 : i64} {
  func.func @transformer_layer_kernel(%arg0: i32, %arg1: memref<1x12x32xbf16, #tpu.memory_space<vmem>>, %arg2: memref<1x8x32xf32, #tpu.memory_space<vmem>>, %arg3: memref<32x32xbf16, #tpu.memory_space<vmem>>, %arg4: memref<1x32xf32, #tpu.memory_space<vmem>>, %arg5: memref<32x64xbf16, #tpu.memory_space<vmem>>, %arg6: memref<1x64xf32, #tpu.memory_space<vmem>>, %arg7: memref<32x32xbf16, #tpu.memory_space<vmem>>, %arg8: memref<1x32xf32, #tpu.memory_space<vmem>>, %arg9: memref<1x32xf32, #tpu.memory_space<vmem>>, %arg10: memref<1x32xf32, #tpu.memory_space<vmem>>, %arg11: memref<32x128xbf16, #tpu.memory_space<vmem>>, %arg12: memref<1x128xf32, #tpu.memory_space<vmem>>, %arg13: memref<128x32xbf16, #tpu.memory_space<vmem>>, %arg14: memref<1x32xf32, #tpu.memory_space<vmem>>, %arg15: memref<1x32xf32, #tpu.memory_space<vmem>>, %arg16: memref<1x32xf32, #tpu.memory_space<vmem>>, %arg17: memref<1x8x32xf32, #tpu.memory_space<vmem>>) attributes {dimension_semantics = [#tpu.dimension_semantics<parallel>], iteration_bounds = array<i64: 2>, scalar_prefetch = 0 : i64, scratch_operands = 0 : i64, tpu.core_type = #tpu.core_type<tc>, window_params = [{transform_indices = @transform_0, window_bounds = array<i64: 1, 12, 32>}, {transform_indices = @transform_1, window_bounds = array<i64: 1, 8, 32>}, {pipeline_mode = #tpu.pipeline_mode<synchronous>, transform_indices = @transform_2, window_bounds = array<i64: 32, 32>}, {pipeline_mode = #tpu.pipeline_mode<synchronous>, transform_indices = @transform_3, window_bounds = array<i64: 1, 32>}, {pipeline_mode = #tpu.pipeline_mode<synchronous>, transform_indices = @transform_4, window_bounds = array<i64: 32, 64>}, {pipeline_mode = #tpu.pipeline_mode<synchronous>, transform_indices = @transform_5, window_bounds = array<i64: 1, 64>}, {pipeline_mode = #tpu.pipeline_mode<synchronous>, transform_indices = @transform_6, window_bounds = array<i64: 32, 32>}, {pipeline_mode = #tpu.pipeline_mode<synchronous>, transform_indices = @transform_7, window_bounds = array<i64: 1, 32>}, {pipeline_mode = #tpu.pipeline_mode<synchronous>, transform_indices = @transform_8, window_bounds = array<i64: 1, 32>}, {pipeline_mode = #tpu.pipeline_mode<synchronous>, transform_indices = @transform_9, window_bounds = array<i64: 1, 32>}, {pipeline_mode = #tpu.pipeline_mode<synchronous>, transform_indices = @transform_10, window_bounds = array<i64: 32, 128>}, {pipeline_mode = #tpu.pipeline_mode<synchronous>, transform_indices = @transform_11, window_bounds = array<i64: 1, 128>}, {pipeline_mode = #tpu.pipeline_mode<synchronous>, transform_indices = @transform_12, window_bounds = array<i64: 128, 32>}, {pipeline_mode = #tpu.pipeline_mode<synchronous>, transform_indices = @transform_13, window_bounds = array<i64: 1, 32>}, {pipeline_mode = #tpu.pipeline_mode<synchronous>, transform_indices = @transform_14, window_bounds = array<i64: 1, 32>}, {pipeline_mode = #tpu.pipeline_mode<synchronous>, transform_indices = @transform_15, window_bounds = array<i64: 1, 32>}, {transform_indices = @transform_16, window_bounds = array<i64: 1, 8, 32>}]} {
    %c0 = arith.constant 0 : index
    %c0_0 = arith.constant 0 : index
    %c0_1 = arith.constant 0 : index
    %0 = vector.load %arg1[%c0, %c0_0, %c0_1] : memref<1x12x32xbf16, #tpu.memory_space<vmem>>, vector<1x12x32xbf16>
    %c0_2 = arith.constant 0 : index
    %c0_3 = arith.constant 0 : index
    %c0_4 = arith.constant 0 : index
    %1 = vector.load %arg2[%c0_2, %c0_3, %c0_4] : memref<1x8x32xf32, #tpu.memory_space<vmem>>, vector<1x8x32xf32>
    %2 = vector.shape_cast %1 : vector<1x8x32xf32> to vector<8x32xf32>
    %3 = vector.shape_cast %0 : vector<1x12x32xbf16> to vector<12x32xbf16>
    %c0_5 = arith.constant 0 : index
    %c0_6 = arith.constant 0 : index
    %4 = vector.load %arg5[%c0_5, %c0_6] : memref<32x64xbf16, #tpu.memory_space<vmem>>, vector<32x64xbf16>
    %cst = arith.constant dense<0.000000e+00> : vector<12x64xf32>
    %5 = tpu.matmul %3, %4, %cst {dimension_numbers = #tpu.dot_dimension_numbers<[1], [0], [0], [1], [0, 0, 1, 1], [], []>} : vector<12x32xbf16>, vector<32x64xbf16>, vector<12x64xf32> -> vector<12x64xf32>
    %c0_7 = arith.constant 0 : index
    %c0_8 = arith.constant 0 : index
    %6 = vector.load %arg6[%c0_7, %c0_8] : memref<1x64xf32, #tpu.memory_space<vmem>>, vector<1x64xf32>
    %7 = vector.broadcast %6 : vector<1x64xf32> to vector<12x64xf32>
    %8 = arith.addf %5, %7 : vector<12x64xf32>
    %9 = vector.shape_cast %8 : vector<12x64xf32> to vector<1x12x64xf32>
    %10 = vector.extract_strided_slice %9 {offsets = [0, 0, 0], sizes = [1, 12, 32], strides = [1, 1, 1]} : vector<1x12x64xf32> to vector<1x12x32xf32>
    %11 = vector.extract_strided_slice %9 {offsets = [0, 0, 32], sizes = [1, 12, 32], strides = [1, 1, 1]} : vector<1x12x64xf32> to vector<1x12x32xf32>
    %12 = arith.truncf %2 : vector<8x32xf32> to vector<8x32xbf16>
    %c0_9 = arith.constant 0 : index
    %c0_10 = arith.constant 0 : index
    %13 = vector.load %arg3[%c0_9, %c0_10] : memref<32x32xbf16, #tpu.memory_space<vmem>>, vector<32x32xbf16>
    %cst_11 = arith.constant dense<0.000000e+00> : vector<8x32xf32>
    %14 = tpu.matmul %12, %13, %cst_11 {dimension_numbers = #tpu.dot_dimension_numbers<[1], [0], [0], [1], [0, 0, 1, 1], [], []>} : vector<8x32xbf16>, vector<32x32xbf16>, vector<8x32xf32> -> vector<8x32xf32>
    %c0_12 = arith.constant 0 : index
    %c0_13 = arith.constant 0 : index
    %15 = vector.load %arg4[%c0_12, %c0_13] : memref<1x32xf32, #tpu.memory_space<vmem>>, vector<1x32xf32>
    %16 = vector.broadcast %15 : vector<1x32xf32> to vector<8x32xf32>
    %17 = arith.addf %14, %16 : vector<8x32xf32>
    %18 = vector.shape_cast %17 : vector<8x32xf32> to vector<1x8x32xf32>
    %19 = vector.extract_strided_slice %18 {offsets = [0, 0, 0], sizes = [1, 8, 8], strides = [1, 1, 1]} : vector<1x8x32xf32> to vector<1x8x8xf32>
    %20 = arith.truncf %19 : vector<1x8x8xf32> to vector<1x8x8xbf16>
    %21 = vector.extract_strided_slice %10 {offsets = [0, 0, 0], sizes = [1, 12, 8], strides = [1, 1, 1]} : vector<1x12x32xf32> to vector<1x12x8xf32>
    %22 = arith.truncf %21 : vector<1x12x8xf32> to vector<1x12x8xbf16>
    %23 = vector.extract_strided_slice %11 {offsets = [0, 0, 0], sizes = [1, 12, 8], strides = [1, 1, 1]} : vector<1x12x32xf32> to vector<1x12x8xf32>
    %24 = arith.truncf %23 : vector<1x12x8xf32> to vector<1x12x8xbf16>
    "tpu.trace_start"() <{level = 10 : i32, message = "bqd,bkd->bqk"}> : () -> ()
    %cst_14 = arith.constant dense<0.000000e+00> : vector<1x8x12xf32>
    %25 = tpu.matmul %20, %22, %cst_14 {dimension_numbers = #tpu.dot_dimension_numbers<[2], [2], [1], [1], [0, 0, 0, 1, 1, 1], [0], [0]>} : vector<1x8x8xbf16>, vector<1x12x8xbf16>, vector<1x8x12xf32> -> vector<1x8x12xf32>
    "tpu.trace_stop"() : () -> ()
    %cst_15 = arith.constant dense<0xFF800000> : vector<1x8xf32>
    %26 = vector.multi_reduction <maximumf>, %25, %cst_15 [2] : vector<1x8x12xf32> to vector<1x8xf32>
    %27 = vector.shape_cast %26 : vector<1x8xf32> to vector<1x8x1xf32>
    %28 = vector.broadcast %27 : vector<1x8x1xf32> to vector<1x8x12xf32>
    %29 = arith.subf %25, %28 : vector<1x8x12xf32>
    %30 = math.exp %29 : vector<1x8x12xf32>
    %cst_16 = arith.constant dense<0.000000e+00> : vector<1x8xf32>
    %31 = vector.multi_reduction <add>, %30, %cst_16 [2] : vector<1x8x12xf32> to vector<1x8xf32>
    %32 = vector.shape_cast %31 : vector<1x8xf32> to vector<1x8x1xf32>
    %33 = tpu.reciprocal %32 {approx = true} : vector<1x8x1xf32> -> vector<1x8x1xf32>
    %34 = vector.broadcast %33 : vector<1x8x1xf32> to vector<1x8x12xf32>
    %35 = arith.mulf %30, %34 : vector<1x8x12xf32>
    %36 = arith.truncf %35 : vector<1x8x12xf32> to vector<1x8x12xbf16>
    "tpu.trace_start"() <{level = 10 : i32, message = "bqk,bkd->bqd"}> : () -> ()
    %cst_17 = arith.constant dense<0.000000e+00> : vector<1x8x8xf32>
    %37 = tpu.matmul %36, %24, %cst_17 {dimension_numbers = #tpu.dot_dimension_numbers<[2], [1], [1], [2], [0, 0, 0, 1, 1, 2], [0], [0]>} : vector<1x8x12xbf16>, vector<1x12x8xbf16>, vector<1x8x8xf32> -> vector<1x8x8xf32>
    "tpu.trace_stop"() : () -> ()
    %38 = vector.extract_strided_slice %18 {offsets = [0, 0, 8], sizes = [1, 8, 8], strides = [1, 1, 1]} : vector<1x8x32xf32> to vector<1x8x8xf32>
    %39 = arith.truncf %38 : vector<1x8x8xf32> to vector<1x8x8xbf16>
    %40 = vector.extract_strided_slice %10 {offsets = [0, 0, 8], sizes = [1, 12, 8], strides = [1, 1, 1]} : vector<1x12x32xf32> to vector<1x12x8xf32>
    %41 = arith.truncf %40 : vector<1x12x8xf32> to vector<1x12x8xbf16>
    %42 = vector.extract_strided_slice %11 {offsets = [0, 0, 8], sizes = [1, 12, 8], strides = [1, 1, 1]} : vector<1x12x32xf32> to vector<1x12x8xf32>
    %43 = arith.truncf %42 : vector<1x12x8xf32> to vector<1x12x8xbf16>
    "tpu.trace_start"() <{level = 10 : i32, message = "bqd,bkd->bqk"}> : () -> ()
    %cst_18 = arith.constant dense<0.000000e+00> : vector<1x8x12xf32>
    %44 = tpu.matmul %39, %41, %cst_18 {dimension_numbers = #tpu.dot_dimension_numbers<[2], [2], [1], [1], [0, 0, 0, 1, 1, 1], [0], [0]>} : vector<1x8x8xbf16>, vector<1x12x8xbf16>, vector<1x8x12xf32> -> vector<1x8x12xf32>
    "tpu.trace_stop"() : () -> ()
    %cst_19 = arith.constant dense<0xFF800000> : vector<1x8xf32>
    %45 = vector.multi_reduction <maximumf>, %44, %cst_19 [2] : vector<1x8x12xf32> to vector<1x8xf32>
    %46 = vector.shape_cast %45 : vector<1x8xf32> to vector<1x8x1xf32>
    %47 = vector.broadcast %46 : vector<1x8x1xf32> to vector<1x8x12xf32>
    %48 = arith.subf %44, %47 : vector<1x8x12xf32>
    %49 = math.exp %48 : vector<1x8x12xf32>
    %cst_20 = arith.constant dense<0.000000e+00> : vector<1x8xf32>
    %50 = vector.multi_reduction <add>, %49, %cst_20 [2] : vector<1x8x12xf32> to vector<1x8xf32>
    %51 = vector.shape_cast %50 : vector<1x8xf32> to vector<1x8x1xf32>
    %52 = tpu.reciprocal %51 {approx = true} : vector<1x8x1xf32> -> vector<1x8x1xf32>
    %53 = vector.broadcast %52 : vector<1x8x1xf32> to vector<1x8x12xf32>
    %54 = arith.mulf %49, %53 : vector<1x8x12xf32>
    %55 = arith.truncf %54 : vector<1x8x12xf32> to vector<1x8x12xbf16>
    "tpu.trace_start"() <{level = 10 : i32, message = "bqk,bkd->bqd"}> : () -> ()
    %cst_21 = arith.constant dense<0.000000e+00> : vector<1x8x8xf32>
    %56 = tpu.matmul %55, %43, %cst_21 {dimension_numbers = #tpu.dot_dimension_numbers<[2], [1], [1], [2], [0, 0, 0, 1, 1, 2], [0], [0]>} : vector<1x8x12xbf16>, vector<1x12x8xbf16>, vector<1x8x8xf32> -> vector<1x8x8xf32>
    "tpu.trace_stop"() : () -> ()
    %57 = vector.extract_strided_slice %18 {offsets = [0, 0, 16], sizes = [1, 8, 8], strides = [1, 1, 1]} : vector<1x8x32xf32> to vector<1x8x8xf32>
    %58 = arith.truncf %57 : vector<1x8x8xf32> to vector<1x8x8xbf16>
    %59 = vector.extract_strided_slice %10 {offsets = [0, 0, 16], sizes = [1, 12, 8], strides = [1, 1, 1]} : vector<1x12x32xf32> to vector<1x12x8xf32>
    %60 = arith.truncf %59 : vector<1x12x8xf32> to vector<1x12x8xbf16>
    %61 = vector.extract_strided_slice %11 {offsets = [0, 0, 16], sizes = [1, 12, 8], strides = [1, 1, 1]} : vector<1x12x32xf32> to vector<1x12x8xf32>
    %62 = arith.truncf %61 : vector<1x12x8xf32> to vector<1x12x8xbf16>
    "tpu.trace_start"() <{level = 10 : i32, message = "bqd,bkd->bqk"}> : () -> ()
    %cst_22 = arith.constant dense<0.000000e+00> : vector<1x8x12xf32>
    %63 = tpu.matmul %58, %60, %cst_22 {dimension_numbers = #tpu.dot_dimension_numbers<[2], [2], [1], [1], [0, 0, 0, 1, 1, 1], [0], [0]>} : vector<1x8x8xbf16>, vector<1x12x8xbf16>, vector<1x8x12xf32> -> vector<1x8x12xf32>
    "tpu.trace_stop"() : () -> ()
    %cst_23 = arith.constant dense<0xFF800000> : vector<1x8xf32>
    %64 = vector.multi_reduction <maximumf>, %63, %cst_23 [2] : vector<1x8x12xf32> to vector<1x8xf32>
    %65 = vector.shape_cast %64 : vector<1x8xf32> to vector<1x8x1xf32>
    %66 = vector.broadcast %65 : vector<1x8x1xf32> to vector<1x8x12xf32>
    %67 = arith.subf %63, %66 : vector<1x8x12xf32>
    %68 = math.exp %67 : vector<1x8x12xf32>
    %cst_24 = arith.constant dense<0.000000e+00> : vector<1x8xf32>
    %69 = vector.multi_reduction <add>, %68, %cst_24 [2] : vector<1x8x12xf32> to vector<1x8xf32>
    %70 = vector.shape_cast %69 : vector<1x8xf32> to vector<1x8x1xf32>
    %71 = tpu.reciprocal %70 {approx = true} : vector<1x8x1xf32> -> vector<1x8x1xf32>
    %72 = vector.broadcast %71 : vector<1x8x1xf32> to vector<1x8x12xf32>
    %73 = arith.mulf %68, %72 : vector<1x8x12xf32>
    %74 = arith.truncf %73 : vector<1x8x12xf32> to vector<1x8x12xbf16>
    "tpu.trace_start"() <{level = 10 : i32, message = "bqk,bkd->bqd"}> : () -> ()
    %cst_25 = arith.constant dense<0.000000e+00> : vector<1x8x8xf32>
    %75 = tpu.matmul %74, %62, %cst_25 {dimension_numbers = #tpu.dot_dimension_numbers<[2], [1], [1], [2], [0, 0, 0, 1, 1, 2], [0], [0]>} : vector<1x8x12xbf16>, vector<1x12x8xbf16>, vector<1x8x8xf32> -> vector<1x8x8xf32>
    "tpu.trace_stop"() : () -> ()
    %76 = vector.extract_strided_slice %18 {offsets = [0, 0, 24], sizes = [1, 8, 8], strides = [1, 1, 1]} : vector<1x8x32xf32> to vector<1x8x8xf32>
    %77 = arith.truncf %76 : vector<1x8x8xf32> to vector<1x8x8xbf16>
    %78 = vector.extract_strided_slice %10 {offsets = [0, 0, 24], sizes = [1, 12, 8], strides = [1, 1, 1]} : vector<1x12x32xf32> to vector<1x12x8xf32>
    %79 = arith.truncf %78 : vector<1x12x8xf32> to vector<1x12x8xbf16>
    %80 = vector.extract_strided_slice %11 {offsets = [0, 0, 24], sizes = [1, 12, 8], strides = [1, 1, 1]} : vector<1x12x32xf32> to vector<1x12x8xf32>
    %81 = arith.truncf %80 : vector<1x12x8xf32> to vector<1x12x8xbf16>
    "tpu.trace_start"() <{level = 10 : i32, message = "bqd,bkd->bqk"}> : () -> ()
    %cst_26 = arith.constant dense<0.000000e+00> : vector<1x8x12xf32>
    %82 = tpu.matmul %77, %79, %cst_26 {dimension_numbers = #tpu.dot_dimension_numbers<[2], [2], [1], [1], [0, 0, 0, 1, 1, 1], [0], [0]>} : vector<1x8x8xbf16>, vector<1x12x8xbf16>, vector<1x8x12xf32> -> vector<1x8x12xf32>
    "tpu.trace_stop"() : () -> ()
    %cst_27 = arith.constant dense<0xFF800000> : vector<1x8xf32>
    %83 = vector.multi_reduction <maximumf>, %82, %cst_27 [2] : vector<1x8x12xf32> to vector<1x8xf32>
    %84 = vector.shape_cast %83 : vector<1x8xf32> to vector<1x8x1xf32>
    %85 = vector.broadcast %84 : vector<1x8x1xf32> to vector<1x8x12xf32>
    %86 = arith.subf %82, %85 : vector<1x8x12xf32>
    %87 = math.exp %86 : vector<1x8x12xf32>
    %cst_28 = arith.constant dense<0.000000e+00> : vector<1x8xf32>
    %88 = vector.multi_reduction <add>, %87, %cst_28 [2] : vector<1x8x12xf32> to vector<1x8xf32>
    %89 = vector.shape_cast %88 : vector<1x8xf32> to vector<1x8x1xf32>
    %90 = tpu.reciprocal %89 {approx = true} : vector<1x8x1xf32> -> vector<1x8x1xf32>
    %91 = vector.broadcast %90 : vector<1x8x1xf32> to vector<1x8x12xf32>
    %92 = arith.mulf %87, %91 : vector<1x8x12xf32>
    %93 = arith.truncf %92 : vector<1x8x12xf32> to vector<1x8x12xbf16>
    "tpu.trace_start"() <{level = 10 : i32, message = "bqk,bkd->bqd"}> : () -> ()
    %cst_29 = arith.constant dense<0.000000e+00> : vector<1x8x8xf32>
    %94 = tpu.matmul %93, %81, %cst_29 {dimension_numbers = #tpu.dot_dimension_numbers<[2], [1], [1], [2], [0, 0, 0, 1, 1, 2], [0], [0]>} : vector<1x8x12xbf16>, vector<1x12x8xbf16>, vector<1x8x8xf32> -> vector<1x8x8xf32>
    "tpu.trace_stop"() : () -> ()
    %95 = tpu.concatenate %37, %56, %75, %94 in 2 : vector<1x8x8xf32>, vector<1x8x8xf32>, vector<1x8x8xf32>, vector<1x8x8xf32> -> vector<1x8x32xf32>
    %96 = vector.shape_cast %95 : vector<1x8x32xf32> to vector<8x32xf32>
    %97 = arith.truncf %96 : vector<8x32xf32> to vector<8x32xbf16>
    %c0_30 = arith.constant 0 : index
    %c0_31 = arith.constant 0 : index
    %98 = vector.load %arg7[%c0_30, %c0_31] : memref<32x32xbf16, #tpu.memory_space<vmem>>, vector<32x32xbf16>
    %cst_32 = arith.constant dense<0.000000e+00> : vector<8x32xf32>
    %99 = tpu.matmul %97, %98, %cst_32 {dimension_numbers = #tpu.dot_dimension_numbers<[1], [0], [0], [1], [0, 0, 1, 1], [], []>} : vector<8x32xbf16>, vector<32x32xbf16>, vector<8x32xf32> -> vector<8x32xf32>
    %c0_33 = arith.constant 0 : index
    %c0_34 = arith.constant 0 : index
    %100 = vector.load %arg8[%c0_33, %c0_34] : memref<1x32xf32, #tpu.memory_space<vmem>>, vector<1x32xf32>
    %101 = vector.broadcast %100 : vector<1x32xf32> to vector<8x32xf32>
    %102 = arith.addf %99, %101 : vector<8x32xf32>
    %103 = arith.addf %2, %102 : vector<8x32xf32>
    %c0_35 = arith.constant 0 : index
    %c0_36 = arith.constant 0 : index
    %104 = vector.load %arg9[%c0_35, %c0_36] : memref<1x32xf32, #tpu.memory_space<vmem>>, vector<1x32xf32>
    %c0_37 = arith.constant 0 : index
    %c0_38 = arith.constant 0 : index
    %105 = vector.load %arg10[%c0_37, %c0_38] : memref<1x32xf32, #tpu.memory_space<vmem>>, vector<1x32xf32>
    %cst_39 = arith.constant dense<0.000000e+00> : vector<8xf32>
    %106 = vector.multi_reduction <add>, %103, %cst_39 [1] : vector<8x32xf32> to vector<8xf32>
    %107 = vector.shape_cast %106 : vector<8xf32> to vector<8x1xf32>
    %cst_40 = arith.constant 3.200000e+01 : f32
    %108 = vector.broadcast %cst_40 : f32 to vector<8x1xf32>
    %109 = arith.divf %107, %108 : vector<8x1xf32>
    %110 = vector.broadcast %109 : vector<8x1xf32> to vector<8x32xf32>
    %111 = arith.subf %103, %110 : vector<8x32xf32>
    %112 = arith.mulf %111, %111 : vector<8x32xf32>
    %cst_41 = arith.constant dense<0.000000e+00> : vector<8xf32>
    %113 = vector.multi_reduction <add>, %112, %cst_41 [1] : vector<8x32xf32> to vector<8xf32>
    %114 = vector.shape_cast %113 : vector<8xf32> to vector<8x1xf32>
    %cst_42 = arith.constant 3.200000e+01 : f32
    %115 = vector.broadcast %cst_42 : f32 to vector<8x1xf32>
    %116 = arith.divf %114, %115 : vector<8x1xf32>
    %117 = vector.broadcast %109 : vector<8x1xf32> to vector<8x32xf32>
    %118 = arith.subf %103, %117 : vector<8x32xf32>
    %cst_43 = arith.constant 9.99999974E-6 : f32
    %119 = vector.broadcast %cst_43 : f32 to vector<8x1xf32>
    %120 = arith.addf %116, %119 : vector<8x1xf32>
    %121 = math.rsqrt %120 : vector<8x1xf32>
    %122 = vector.broadcast %121 : vector<8x1xf32> to vector<8x32xf32>
    %123 = arith.mulf %118, %122 : vector<8x32xf32>
    %124 = vector.broadcast %104 : vector<1x32xf32> to vector<8x32xf32>
    %125 = arith.mulf %123, %124 : vector<8x32xf32>
    %126 = vector.broadcast %105 : vector<1x32xf32> to vector<8x32xf32>
    %127 = arith.addf %125, %126 : vector<8x32xf32>
    %128 = arith.truncf %127 : vector<8x32xf32> to vector<8x32xbf16>
    %c0_44 = arith.constant 0 : index
    %c0_45 = arith.constant 0 : index
    %129 = vector.load %arg11[%c0_44, %c0_45] : memref<32x128xbf16, #tpu.memory_space<vmem>>, vector<32x128xbf16>
    %cst_46 = arith.constant dense<0.000000e+00> : vector<8x128xf32>
    %130 = tpu.matmul %128, %129, %cst_46 {dimension_numbers = #tpu.dot_dimension_numbers<[1], [0], [0], [1], [0, 0, 1, 1], [], []>} : vector<8x32xbf16>, vector<32x128xbf16>, vector<8x128xf32> -> vector<8x128xf32>
    %c0_47 = arith.constant 0 : index
    %c0_48 = arith.constant 0 : index
    %131 = vector.load %arg12[%c0_47, %c0_48] : memref<1x128xf32, #tpu.memory_space<vmem>>, vector<1x128xf32>
    %132 = vector.broadcast %131 : vector<1x128xf32> to vector<8x128xf32>
    %133 = arith.addf %130, %132 : vector<8x128xf32>
    %cst_49 = arith.constant 5.000000e-01 : f32
    %134 = vector.broadcast %cst_49 : f32 to vector<8x128xf32>
    %135 = arith.mulf %134, %133 : vector<8x128xf32>
    %cst_50 = arith.constant 0.707106769 : f32
    %136 = vector.broadcast %cst_50 : f32 to vector<8x128xf32>
    %137 = arith.mulf %133, %136 : vector<8x128xf32>
    %138 = math.erf %137 : vector<8x128xf32>
    %cst_51 = arith.constant 1.000000e+00 : f32
    %139 = vector.broadcast %cst_51 : f32 to vector<8x128xf32>
    %140 = arith.addf %139, %138 : vector<8x128xf32>
    %141 = arith.mulf %135, %140 : vector<8x128xf32>
    %142 = arith.truncf %141 : vector<8x128xf32> to vector<8x128xbf16>
    %c0_52 = arith.constant 0 : index
    %c0_53 = arith.constant 0 : index
    %143 = vector.load %arg13[%c0_52, %c0_53] : memref<128x32xbf16, #tpu.memory_space<vmem>>, vector<128x32xbf16>
    %cst_54 = arith.constant dense<0.000000e+00> : vector<8x32xf32>
    %144 = tpu.matmul %142, %143, %cst_54 {dimension_numbers = #tpu.dot_dimension_numbers<[1], [0], [0], [1], [0, 0, 1, 1], [], []>} : vector<8x128xbf16>, vector<128x32xbf16>, vector<8x32xf32> -> vector<8x32xf32>
    %c0_55 = arith.constant 0 : index
    %c0_56 = arith.constant 0 : index
    %145 = vector.load %arg14[%c0_55, %c0_56] : memref<1x32xf32, #tpu.memory_space<vmem>>, vector<1x32xf32>
    %146 = vector.broadcast %145 : vector<1x32xf32> to vector<8x32xf32>
    %147 = arith.addf %144, %146 : vector<8x32xf32>
    %148 = arith.addf %127, %147 : vector<8x32xf32>
    %c0_57 = arith.constant 0 : index
    %c0_58 = arith.constant 0 : index
    %149 = vector.load %arg15[%c0_57, %c0_58] : memref<1x32xf32, #tpu.memory_space<vmem>>, vector<1x32xf32>
    %c0_59 = arith.constant 0 : index
    %c0_60 = arith.constant 0 : index
    %150 = vector.load %arg16[%c0_59, %c0_60] : memref<1x32xf32, #tpu.memory_space<vmem>>, vector<1x32xf32>
    %cst_61 = arith.constant dense<0.000000e+00> : vector<8xf32>
    %151 = vector.multi_reduction <add>, %148, %cst_61 [1] : vector<8x32xf32> to vector<8xf32>
    %152 = vector.shape_cast %151 : vector<8xf32> to vector<8x1xf32>
    %cst_62 = arith.constant 3.200000e+01 : f32
    %153 = vector.broadcast %cst_62 : f32 to vector<8x1xf32>
    %154 = arith.divf %152, %153 : vector<8x1xf32>
    %155 = vector.broadcast %154 : vector<8x1xf32> to vector<8x32xf32>
    %156 = arith.subf %148, %155 : vector<8x32xf32>
    %157 = arith.mulf %156, %156 : vector<8x32xf32>
    %cst_63 = arith.constant dense<0.000000e+00> : vector<8xf32>
    %158 = vector.multi_reduction <add>, %157, %cst_63 [1] : vector<8x32xf32> to vector<8xf32>
    %159 = vector.shape_cast %158 : vector<8xf32> to vector<8x1xf32>
    %cst_64 = arith.constant 3.200000e+01 : f32
    %160 = vector.broadcast %cst_64 : f32 to vector<8x1xf32>
    %161 = arith.divf %159, %160 : vector<8x1xf32>
    %162 = vector.broadcast %154 : vector<8x1xf32> to vector<8x32xf32>
    %163 = arith.subf %148, %162 : vector<8x32xf32>
    %cst_65 = arith.constant 9.99999974E-6 : f32
    %164 = vector.broadcast %cst_65 : f32 to vector<8x1xf32>
    %165 = arith.addf %161, %164 : vector<8x1xf32>
    %166 = math.rsqrt %165 : vector<8x1xf32>
    %167 = vector.broadcast %166 : vector<8x1xf32> to vector<8x32xf32>
    %168 = arith.mulf %163, %167 : vector<8x32xf32>
    %169 = vector.broadcast %149 : vector<1x32xf32> to vector<8x32xf32>
    %170 = arith.mulf %168, %169 : vector<8x32xf32>
    %171 = vector.broadcast %150 : vector<1x32xf32> to vector<8x32xf32>
    %172 = arith.addf %170, %171 : vector<8x32xf32>
    %173 = vector.shape_cast %172 : vector<8x32xf32> to vector<1x8x32xf32>
    %c0_66 = arith.constant 0 : index
    %c0_67 = arith.constant 0 : index
    %c0_68 = arith.constant 0 : index
    %174 = vector.load %arg17[%c0_66, %c0_67, %c0_68] : memref<1x8x32xf32, #tpu.memory_space<vmem>>, vector<1x8x32xf32>
    tpu.vector_store %arg17[%c0_66, %c0_67, %c0_68], %173 {strides = array<i32>} : memref<1x8x32xf32, #tpu.memory_space<vmem>>, vector<1x8x32xf32>,
    return
  }
  func.func @transform_0(%arg0: i32) -> (i32, i32, i32) {
    %c0_i32 = arith.constant 0 : i32
    %c0_i32_0 = arith.constant 0 : i32
    %c0_i32_1 = arith.constant 0 : i32
    return %arg0, %c0_i32, %c0_i32_0 : i32, i32, i32
  }
  func.func @transform_1(%arg0: i32) -> (i32, i32, i32) {
    %c0_i32 = arith.constant 0 : i32
    %c0_i32_0 = arith.constant 0 : i32
    %c0_i32_1 = arith.constant 0 : i32
    return %arg0, %c0_i32, %c0_i32_0 : i32, i32, i32
  }
  func.func @transform_2(%arg0: i32) -> (i32, i32) {
    %c0_i32 = arith.constant 0 : i32
    %c0_i32_0 = arith.constant 0 : i32
    %c0_i32_1 = arith.constant 0 : i32
    return %c0_i32, %c0_i32_0 : i32, i32
  }
  func.func @transform_3(%arg0: i32) -> (i32, i32) {
    %c0_i32 = arith.constant 0 : i32
    %c0_i32_0 = arith.constant 0 : i32
    %c0_i32_1 = arith.constant 0 : i32
    return %c0_i32, %c0_i32_0 : i32, i32
  }
  func.func @transform_4(%arg0: i32) -> (i32, i32) {
    %c0_i32 = arith.constant 0 : i32
    %c0_i32_0 = arith.constant 0 : i32
    %c0_i32_1 = arith.constant 0 : i32
    return %c0_i32, %c0_i32_0 : i32, i32
  }
  func.func @transform_5(%arg0: i32) -> (i32, i32) {
    %c0_i32 = arith.constant 0 : i32
    %c0_i32_0 = arith.constant 0 : i32
    %c0_i32_1 = arith.constant 0 : i32
    return %c0_i32, %c0_i32_0 : i32, i32
  }
  func.func @transform_6(%arg0: i32) -> (i32, i32) {
    %c0_i32 = arith.constant 0 : i32
    %c0_i32_0 = arith.constant 0 : i32
    %c0_i32_1 = arith.constant 0 : i32
    return %c0_i32, %c0_i32_0 : i32, i32
  }
  func.func @transform_7(%arg0: i32) -> (i32, i32) {
    %c0_i32 = arith.constant 0 : i32
    %c0_i32_0 = arith.constant 0 : i32
    %c0_i32_1 = arith.constant 0 : i32
    return %c0_i32, %c0_i32_0 : i32, i32
  }
  func.func @transform_8(%arg0: i32) -> (i32, i32) {
    %c0_i32 = arith.constant 0 : i32
    %c0_i32_0 = arith.constant 0 : i32
    %c0_i32_1 = arith.constant 0 : i32
    return %c0_i32, %c0_i32_0 : i32, i32
  }
  func.func @transform_9(%arg0: i32) -> (i32, i32) {
    %c0_i32 = arith.constant 0 : i32
    %c0_i32_0 = arith.constant 0 : i32
    %c0_i32_1 = arith.constant 0 : i32
    return %c0_i32, %c0_i32_0 : i32, i32
  }
  func.func @transform_10(%arg0: i32) -> (i32, i32) {
    %c0_i32 = arith.constant 0 : i32
    %c0_i32_0 = arith.constant 0 : i32
    %c0_i32_1 = arith.constant 0 : i32
    return %c0_i32, %c0_i32_0 : i32, i32
  }
  func.func @transform_11(%arg0: i32) -> (i32, i32) {
    %c0_i32 = arith.constant 0 : i32
    %c0_i32_0 = arith.constant 0 : i32
    %c0_i32_1 = arith.constant 0 : i32
    return %c0_i32, %c0_i32_0 : i32, i32
  }
  func.func @transform_12(%arg0: i32) -> (i32, i32) {
    %c0_i32 = arith.constant 0 : i32
    %c0_i32_0 = arith.constant 0 : i32
    %c0_i32_1 = arith.constant 0 : i32
    return %c0_i32, %c0_i32_0 : i32, i32
  }
  func.func @transform_13(%arg0: i32) -> (i32, i32) {
    %c0_i32 = arith.constant 0 : i32
    %c0_i32_0 = arith.constant 0 : i32
    %c0_i32_1 = arith.constant 0 : i32
    return %c0_i32, %c0_i32_0 : i32, i32
  }
  func.func @transform_14(%arg0: i32) -> (i32, i32) {
    %c0_i32 = arith.constant 0 : i32
    %c0_i32_0 = arith.constant 0 : i32
    %c0_i32_1 = arith.constant 0 : i32
    return %c0_i32, %c0_i32_0 : i32, i32
  }
  func.func @transform_15(%arg0: i32) -> (i32, i32) {
    %c0_i32 = arith.constant 0 : i32
    %c0_i32_0 = arith.constant 0 : i32
    %c0_i32_1 = arith.constant 0 : i32
    return %c0_i32, %c0_i32_0 : i32, i32
  }
  func.func @transform_16(%arg0: i32) -> (i32, i32, i32) {
    %c0_i32 = arith.constant 0 : i32
    %c0_i32_0 = arith.constant 0 : i32
    %c0_i32_1 = arith.constant 0 : i32
    return %arg0, %c0_i32, %c0_i32_0 : i32, i32, i32
  }
}

</mosaic_0001>

<llo_original>
// kernel: tpu_custom_call.1
$region0: #{tpu_custom_call.1}
  #allocation0 [shape = 'u32[]', space=smem, size = 0x4, offset = 0x4, fixed_abs, tag = 'smem constant byte address 0x4 - core index']
  #allocation1 [shape = 'u32[144,128]{1,0:T(1,128)}', space=vmem, size = 0x12000, scoped, tag = 'internal scratch']
  %s0 = inlined_call_operand.vmem [shape: bf16[2,12,32], index: 0, kind: input, shape index: {}]
  %s1 = inlined_call_operand.vmem [shape: f32[2,8,32], index: 1, kind: input, shape index: {}]
  %s2 = inlined_call_operand.vmem [shape: bf16[32,32], index: 2, kind: input, shape index: {}]
  %s3 = inlined_call_operand.vmem [shape: f32[1,32], index: 3, kind: input, shape index: {}]
  %s4 = inlined_call_operand.vmem [shape: bf16[32,64], index: 4, kind: input, shape index: {}]
  %s5 = inlined_call_operand.vmem [shape: f32[1,64], index: 5, kind: input, shape index: {}]
  %s6 = inlined_call_operand.vmem [shape: bf16[32,32], index: 6, kind: input, shape index: {}]
  %s7 = inlined_call_operand.vmem [shape: f32[1,32], index: 7, kind: input, shape index: {}]
  %s8 = inlined_call_operand.vmem [shape: f32[1,32], index: 8, kind: input, shape index: {}]
  %s9 = inlined_call_operand.vmem [shape: f32[1,32], index: 9, kind: input, shape index: {}]
  %s10 = inlined_call_operand.vmem [shape: bf16[32,128], index: 10, kind: input, shape index: {}]
  %s11 = inlined_call_operand.vmem [shape: f32[1,128], index: 11, kind: input, shape index: {}]
  %s12 = inlined_call_operand.vmem [shape: bf16[128,32], index: 12, kind: input, shape index: {}]
  %s13 = inlined_call_operand.vmem [shape: f32[1,32], index: 13, kind: input, shape index: {}]
  %s14 = inlined_call_operand.vmem [shape: f32[1,32], index: 14, kind: input, shape index: {}]
  %s15 = inlined_call_operand.vmem [shape: f32[1,32], index: 15, kind: input, shape index: {}]
  %s16 = inlined_call_operand.hbm [shape: f32[2,8,32], index: 16, kind: output, shape index: {}]
  %s17 = sld [smem:[#allocation0]]
  $region97: #{tpu_custom_call.1} parent=0
    _
  %s19 = ssub.s32 1, %s17
  %s20 = scalar_select 0, %s19, %s17
  $region1: #{tpu_custom_call.1} parent=0
    #allocation2 [shape = 'u8[8192]{0}', space=vmem, size = 0x2000, scoped, tag = 'output window, operand 0']
    #allocation3 [shape = 's32[2]{0}', space=sflag, size = 0x8, scoped, tag = 'scoped memory for tpu_custom_call.1']
    %21 = vsyncpa [#allocation3], 0
    %s22 = scalar_lea.sflag [#allocation3], 1
    %23 = vsyncpa %s22, 0
    loop: start=0, step=1, limit=4
    $region2: #{tpu_custom_call.1} parent=1 // loop_pre_header
      _
    $region3: #{tpu_custom_call.1} parent=1 // loop_header
      %s25 = sphi 0, %s29
      %p26 = scmp.ge.s32.totalorder %s25, 4
      %s35 = sphi 0, %s37
      %s38 = sphi 0, %s35
      %s39 = sphi 0, %s38
      %s55 = sphi 0, %s39
      %s61 = sphi 0, %s63
      %s64 = sphi 0, %s61
      %s65 = sphi 0, %s64
      %s81 = sphi 0, %s65
      %s85 = sphi 0, %s85
      %s87 = sphi 0, %s85
      %s88 = sphi 0, %s87
      %s102 = sphi 0, %s88
      %s106 = sphi 0, %s106
      %s108 = sphi 0, %s106
      %s109 = sphi 0, %s108
      %s123 = sphi 0, %s109
      %s127 = sphi 0, %s127
      %s129 = sphi 0, %s127
      %s130 = sphi 0, %s129
      %s144 = sphi 0, %s130
      %s148 = sphi 0, %s148
      %s150 = sphi 0, %s148
      %s151 = sphi 0, %s150
      %s165 = sphi 0, %s151
      %s169 = sphi 0, %s169
      %s171 = sphi 0, %s169
      %s172 = sphi 0, %s171
      %s186 = sphi 0, %s172
      %s190 = sphi 0, %s190
      %s192 = sphi 0, %s190
      %s193 = sphi 0, %s192
      %s207 = sphi 0, %s193
      %s211 = sphi 0, %s211
      %s213 = sphi 0, %s211
      %s214 = sphi 0, %s213
      %s228 = sphi 0, %s214
      %s232 = sphi 0, %s232
      %s234 = sphi 0, %s232
      %s235 = sphi 0, %s234
      %s249 = sphi 0, %s235
      %s253 = sphi 0, %s253
      %s255 = sphi 0, %s253
      %s256 = sphi 0, %s255
      %s270 = sphi 0, %s256
      %s274 = sphi 0, %s274
      %s276 = sphi 0, %s274
      %s277 = sphi 0, %s276
      %s291 = sphi 0, %s277
      %s295 = sphi 0, %s295
      %s297 = sphi 0, %s295
      %s298 = sphi 0, %s297
      %s312 = sphi 0, %s298
      %s316 = sphi 0, %s316
      %s318 = sphi 0, %s316
      %s319 = sphi 0, %s318
      %s333 = sphi 0, %s319
      %s337 = sphi 0, %s337
      %s339 = sphi 0, %s337
      %s340 = sphi 0, %s339
      %s354 = sphi 0, %s340
      %s358 = sphi 0, %s358
      %s360 = sphi 0, %s358
      %s361 = sphi 0, %s360
      %s375 = sphi 0, %s361
      %s381 = sphi 0, %s383
      %s384 = sphi 0, %s381
      %s385 = sphi 0, %s384
      %s401 = sphi 0, %s385
    $region4: #{tpu_custom_call.1} parent=1 // loop_header_branch
      %28 = sbr.rel (%p26) target = $region8
    $region5: #{tpu_custom_call.1} parent=1 // loop_body
      %s30 = ssub.s32 %s25, 1
      %s31 = ssub.s32 %s25, 2
      %s32 = sadd.s32 %s25, 1
      %s33 = ssub.s32 %s25, %s32
      %p34 = scmp.eq.s32.totalorder %s33, 0
      %s36 = sadd.s32 %s35, 1
      %s37 = scalar_select %p34, %s35, %s36
      %p40 = pneg %p34
      %p41 = scmp.eq.s32.totalorder %s25, 1
      %p42 = por %p40, %p41
      %p43 = scmp.ne.s32.totalorder %s35, %s38
      %p44 = scmp.eq.s32.totalorder %s25, 0
      %p45 = por %p43, %p44
      %p46 = scmp.ne.s32.totalorder %s35, %s38
      %p47 = scmp.eq.s32.totalorder %s30, 1
      %p48 = por %p46, %p47
      %p49 = scmp.ne.s32.totalorder %s38, %s39
      %p50 = scmp.eq.s32.totalorder %s30, 0
      %p51 = por %p49, %p50
      %p52 = scmp.ne.s32.totalorder %s38, %s39
      %p53 = scmp.eq.s32.totalorder %s31, 1
      %p54 = por %p52, %p53
      %p56 = scmp.ne.s32.totalorder %s39, %s55
      %p57 = scmp.eq.s32.totalorder %s31, 0
      %p58 = por %p56, %p57
      %s59 = ssub.s32 %s25, %s32
      %p60 = scmp.eq.s32.totalorder %s59, 0
      %s62 = sadd.s32 %s61, 1
      %s63 = scalar_select %p60, %s61, %s62
      %p66 = pneg %p60
      %p67 = scmp.eq.s32.totalorder %s25, 1
      %p68 = por %p66, %p67
      %p69 = scmp.ne.s32.totalorder %s61, %s64
      %p70 = scmp.eq.s32.totalorder %s25, 0
      %p71 = por %p69, %p70
      %p72 = scmp.ne.s32.totalorder %s61, %s64
      %p73 = scmp.eq.s32.totalorder %s30, 1
      %p74 = por %p72, %p73
      %p75 = scmp.ne.s32.totalorder %s64, %s65
      %p76 = scmp.eq.s32.totalorder %s30, 0
      %p77 = por %p75, %p76
      %p78 = scmp.ne.s32.totalorder %s64, %s65
      %p79 = scmp.eq.s32.totalorder %s31, 1
      %p80 = por %p78, %p79
      %p82 = scmp.ne.s32.totalorder %s65, %s81
      %p83 = scmp.eq.s32.totalorder %s31, 0
      %p84 = por %p82, %p83
      %s86 = sadd.s32 %s85, 1
      %p89 = scmp.eq.s32.totalorder %s25, 1
      %p90 = scmp.ne.s32.totalorder %s85, %s87
      %p91 = scmp.eq.s32.totalorder %s25, 0
      %p92 = por %p90, %p91
      %p93 = scmp.ne.s32.totalorder %s85, %s87
      %p94 = scmp.eq.s32.totalorder %s30, 1
      %p95 = por %p93, %p94
      %p96 = scmp.ne.s32.totalorder %s87, %s88
      %p97 = scmp.eq.s32.totalorder %s30, 0
      %p98 = por %p96, %p97
      %p99 = scmp.ne.s32.totalorder %s87, %s88
      %p100 = scmp.eq.s32.totalorder %s31, 1
      %p101 = por %p99, %p100
      %p103 = scmp.ne.s32.totalorder %s88, %s102
      %p104 = scmp.eq.s32.totalorder %s31, 0
      %p105 = por %p103, %p104
      %s107 = sadd.s32 %s106, 1
      %p110 = scmp.eq.s32.totalorder %s25, 1
      %p111 = scmp.ne.s32.totalorder %s106, %s108
      %p112 = scmp.eq.s32.totalorder %s25, 0
      %p113 = por %p111, %p112
      %p114 = scmp.ne.s32.totalorder %s106, %s108
      %p115 = scmp.eq.s32.totalorder %s30, 1
      %p116 = por %p114, %p115
      %p117 = scmp.ne.s32.totalorder %s108, %s109
      %p118 = scmp.eq.s32.totalorder %s30, 0
      %p119 = por %p117, %p118
      %p120 = scmp.ne.s32.totalorder %s108, %s109
      %p121 = scmp.eq.s32.totalorder %s31, 1
      %p122 = por %p120, %p121
      %p124 = scmp.ne.s32.totalorder %s109, %s123
      %p125 = scmp.eq.s32.totalorder %s31, 0
      %p126 = por %p124, %p125
      %s128 = sadd.s32 %s127, 1
      %p131 = scmp.eq.s32.totalorder %s25, 1
      %p132 = scmp.ne.s32.totalorder %s127, %s129
      %p133 = scmp.eq.s32.totalorder %s25, 0
      %p134 = por %p132, %p133
      %p135 = scmp.ne.s32.totalorder %s127, %s129
      %p136 = scmp.eq.s32.totalorder %s30, 1
      %p137 = por %p135, %p136
      %p138 = scmp.ne.s32.totalorder %s129, %s130
      %p139 = scmp.eq.s32.totalorder %s30, 0
      %p140 = por %p138, %p139
      %p141 = scmp.ne.s32.totalorder %s129, %s130
      %p142 = scmp.eq.s32.totalorder %s31, 1
      %p143 = por %p141, %p142
      %p145 = scmp.ne.s32.totalorder %s130, %s144
      %p146 = scmp.eq.s32.totalorder %s31, 0
      %p147 = por %p145, %p146
      %s149 = sadd.s32 %s148, 1
      %p152 = scmp.eq.s32.totalorder %s25, 1
      %p153 = scmp.ne.s32.totalorder %s148, %s150
      %p154 = scmp.eq.s32.totalorder %s25, 0
      %p155 = por %p153, %p154
      %p156 = scmp.ne.s32.totalorder %s148, %s150
      %p157 = scmp.eq.s32.totalorder %s30, 1
      %p158 = por %p156, %p157
      %p159 = scmp.ne.s32.totalorder %s150, %s151
      %p160 = scmp.eq.s32.totalorder %s30, 0
      %p161 = por %p159, %p160
      %p162 = scmp.ne.s32.totalorder %s150, %s151
      %p163 = scmp.eq.s32.totalorder %s31, 1
      %p164 = por %p162, %p163
      %p166 = scmp.ne.s32.totalorder %s151, %s165
      %p167 = scmp.eq.s32.totalorder %s31, 0
      %p168 = por %p166, %p167
      %s170 = sadd.s32 %s169, 1
      %p173 = scmp.eq.s32.totalorder %s25, 1
      %p174 = scmp.ne.s32.totalorder %s169, %s171
      %p175 = scmp.eq.s32.totalorder %s25, 0
      %p176 = por %p174, %p175
      %p177 = scmp.ne.s32.totalorder %s169, %s171
      %p178 = scmp.eq.s32.totalorder %s30, 1
      %p179 = por %p177, %p178
      %p180 = scmp.ne.s32.totalorder %s171, %s172
      %p181 = scmp.eq.s32.totalorder %s30, 0
      %p182 = por %p180, %p181
      %p183 = scmp.ne.s32.totalorder %s171, %s172
      %p184 = scmp.eq.s32.totalorder %s31, 1
      %p185 = por %p183, %p184
      %p187 = scmp.ne.s32.totalorder %s172, %s186
      %p188 = scmp.eq.s32.totalorder %s31, 0
      %p189 = por %p187, %p188
      %s191 = sadd.s32 %s190, 1
      %p194 = scmp.eq.s32.totalorder %s25, 1
      %p195 = scmp.ne.s32.totalorder %s190, %s192
      %p196 = scmp.eq.s32.totalorder %s25, 0
      %p197 = por %p195, %p196
      %p198 = scmp.ne.s32.totalorder %s190, %s192
      %p199 = scmp.eq.s32.totalorder %s30, 1
      %p200 = por %p198, %p199
      %p201 = scmp.ne.s32.totalorder %s192, %s193
      %p202 = scmp.eq.s32.totalorder %s30, 0
      %p203 = por %p201, %p202
      %p204 = scmp.ne.s32.totalorder %s192, %s193
      %p205 = scmp.eq.s32.totalorder %s31, 1
      %p206 = por %p204, %p205
      %p208 = scmp.ne.s32.totalorder %s193, %s207
      %p209 = scmp.eq.s32.totalorder %s31, 0
      %p210 = por %p208, %p209
      %s212 = sadd.s32 %s211, 1
      %p215 = scmp.eq.s32.totalorder %s25, 1
      %p216 = scmp.ne.s32.totalorder %s211, %s213
      %p217 = scmp.eq.s32.totalorder %s25, 0
      %p218 = por %p216, %p217
      %p219 = scmp.ne.s32.totalorder %s211, %s213
      %p220 = scmp.eq.s32.totalorder %s30, 1
      %p221 = por %p219, %p220
      %p222 = scmp.ne.s32.totalorder %s213, %s214
      %p223 = scmp.eq.s32.totalorder %s30, 0
      %p224 = por %p222, %p223
      %p225 = scmp.ne.s32.totalorder %s213, %s214
      %p226 = scmp.eq.s32.totalorder %s31, 1
      %p227 = por %p225, %p226
      %p229 = scmp.ne.s32.totalorder %s214, %s228
      %p230 = scmp.eq.s32.totalorder %s31, 0
      %p231 = por %p229, %p230
      %s233 = sadd.s32 %s232, 1
      %p236 = scmp.eq.s32.totalorder %s25, 1
      %p237 = scmp.ne.s32.totalorder %s232, %s234
      %p238 = scmp.eq.s32.totalorder %s25, 0
      %p239 = por %p237, %p238
      %p240 = scmp.ne.s32.totalorder %s232, %s234
      %p241 = scmp.eq.s32.totalorder %s30, 1
      %p242 = por %p240, %p241
      %p243 = scmp.ne.s32.totalorder %s234, %s235
      %p244 = scmp.eq.s32.totalorder %s30, 0
      %p245 = por %p243, %p244
      %p246 = scmp.ne.s32.totalorder %s234, %s235
      %p247 = scmp.eq.s32.totalorder %s31, 1
      %p248 = por %p246, %p247
      %p250 = scmp.ne.s32.totalorder %s235, %s249
      %p251 = scmp.eq.s32.totalorder %s31, 0
      %p252 = por %p250, %p251
      %s254 = sadd.s32 %s253, 1
      %p257 = scmp.eq.s32.totalorder %s25, 1
      %p258 = scmp.ne.s32.totalorder %s253, %s255
      %p259 = scmp.eq.s32.totalorder %s25, 0
      %p260 = por %p258, %p259
      %p261 = scmp.ne.s32.totalorder %s253, %s255
      %p262 = scmp.eq.s32.totalorder %s30, 1
      %p263 = por %p261, %p262
      %p264 = scmp.ne.s32.totalorder %s255, %s256
      %p265 = scmp.eq.s32.totalorder %s30, 0
      %p266 = por %p264, %p265
      %p267 = scmp.ne.s32.totalorder %s255, %s256
      %p268 = scmp.eq.s32.totalorder %s31, 1
      %p269 = por %p267, %p268
      %p271 = scmp.ne.s32.totalorder %s256, %s270
      %p272 = scmp.eq.s32.totalorder %s31, 0
      %p273 = por %p271, %p272
      %s275 = sadd.s32 %s274, 1
      %p278 = scmp.eq.s32.totalorder %s25, 1
      %p279 = scmp.ne.s32.totalorder %s274, %s276
      %p280 = scmp.eq.s32.totalorder %s25, 0
      %p281 = por %p279, %p280
      %p282 = scmp.ne.s32.totalorder %s274, %s276
      %p283 = scmp.eq.s32.totalorder %s30, 1
      %p284 = por %p282, %p283
      %p285 = scmp.ne.s32.totalorder %s276, %s277
      %p286 = scmp.eq.s32.totalorder %s30, 0
      %p287 = por %p285, %p286
      %p288 = scmp.ne.s32.totalorder %s276, %s277
      %p289 = scmp.eq.s32.totalorder %s31, 1
      %p290 = por %p288, %p289
      %p292 = scmp.ne.s32.totalorder %s277, %s291
      %p293 = scmp.eq.s32.totalorder %s31, 0
      %p294 = por %p292, %p293
      %s296 = sadd.s32 %s295, 1
      %p299 = scmp.eq.s32.totalorder %s25, 1
      %p300 = scmp.ne.s32.totalorder %s295, %s297
      %p301 = scmp.eq.s32.totalorder %s25, 0
      %p302 = por %p300, %p301
      %p303 = scmp.ne.s32.totalorder %s295, %s297
      %p304 = scmp.eq.s32.totalorder %s30, 1
      %p305 = por %p303, %p304
      %p306 = scmp.ne.s32.totalorder %s297, %s298
      %p307 = scmp.eq.s32.totalorder %s30, 0
      %p308 = por %p306, %p307
      %p309 = scmp.ne.s32.totalorder %s297, %s298
      %p310 = scmp.eq.s32.totalorder %s31, 1
      %p311 = por %p309, %p310
      %p313 = scmp.ne.s32.totalorder %s298, %s312
      %p314 = scmp.eq.s32.totalorder %s31, 0
      %p315 = por %p313, %p314
      %s317 = sadd.s32 %s316, 1
      %p320 = scmp.eq.s32.totalorder %s25, 1
      %p321 = scmp.ne.s32.totalorder %s316, %s318
      %p322 = scmp.eq.s32.totalorder %s25, 0
      %p323 = por %p321, %p322
      %p324 = scmp.ne.s32.totalorder %s316, %s318
      %p325 = scmp.eq.s32.totalorder %s30, 1
      %p326 = por %p324, %p325
      %p327 = scmp.ne.s32.totalorder %s318, %s319
      %p328 = scmp.eq.s32.totalorder %s30, 0
      %p329 = por %p327, %p328
      %p330 = scmp.ne.s32.totalorder %s318, %s319
      %p331 = scmp.eq.s32.totalorder %s31, 1
      %p332 = por %p330, %p331
      %p334 = scmp.ne.s32.totalorder %s319, %s333
      %p335 = scmp.eq.s32.totalorder %s31, 0
      %p336 = por %p334, %p335
      %s338 = sadd.s32 %s337, 1
      %p341 = scmp.eq.s32.totalorder %s25, 1
      %p342 = scmp.ne.s32.totalorder %s337, %s339
      %p343 = scmp.eq.s32.totalorder %s25, 0
      %p344 = por %p342, %p343
      %p345 = scmp.ne.s32.totalorder %s337, %s339
      %p346 = scmp.eq.s32.totalorder %s30, 1
      %p347 = por %p345, %p346
      %p348 = scmp.ne.s32.totalorder %s339, %s340
      %p349 = scmp.eq.s32.totalorder %s30, 0
      %p350 = por %p348, %p349
      %p351 = scmp.ne.s32.totalorder %s339, %s340
      %p352 = scmp.eq.s32.totalorder %s31, 1
      %p353 = por %p351, %p352
      %p355 = scmp.ne.s32.totalorder %s340, %s354
      %p356 = scmp.eq.s32.totalorder %s31, 0
      %p357 = por %p355, %p356
      %s359 = sadd.s32 %s358, 1
      %p362 = scmp.eq.s32.totalorder %s25, 1
      %p363 = scmp.ne.s32.totalorder %s358, %s360
      %p364 = scmp.eq.s32.totalorder %s25, 0
      %p365 = por %p363, %p364
      %p366 = scmp.ne.s32.totalorder %s358, %s360
      %p367 = scmp.eq.s32.totalorder %s30, 1
      %p368 = por %p366, %p367
      %p369 = scmp.ne.s32.totalorder %s360, %s361
      %p370 = scmp.eq.s32.totalorder %s30, 0
      %p371 = por %p369, %p370
      %p372 = scmp.ne.s32.totalorder %s360, %s361
      %p373 = scmp.eq.s32.totalorder %s31, 1
      %p374 = por %p372, %p373
      %p376 = scmp.ne.s32.totalorder %s361, %s375
      %p377 = scmp.eq.s32.totalorder %s31, 0
      %p378 = por %p376, %p377
      %s379 = ssub.s32 %s25, %s32
      %p380 = scmp.eq.s32.totalorder %s379, 0
      %s382 = sadd.s32 %s381, 1
      %s383 = scalar_select %p380, %s381, %s382
      %p386 = pneg %p380
      %p387 = scmp.eq.s32.totalorder %s25, 1
      %p388 = por %p386, %p387
      %p389 = scmp.ne.s32.totalorder %s381, %s384
      %p390 = scmp.eq.s32.totalorder %s25, 0
      %p391 = por %p389, %p390
      %p392 = scmp.ne.s32.totalorder %s381, %s384
      %p393 = scmp.eq.s32.totalorder %s30, 1
      %p394 = por %p392, %p393
      %p395 = scmp.ne.s32.totalorder %s384, %s385
      %p396 = scmp.eq.s32.totalorder %s30, 0
      %p397 = por %p395, %p396
      %p398 = scmp.ne.s32.totalorder %s384, %s385
      %p399 = scmp.eq.s32.totalorder %s31, 1
      %p400 = por %p398, %p399
      %p402 = scmp.ne.s32.totalorder %s385, %s401
      %p403 = scmp.eq.s32.totalorder %s31, 0
      %p404 = por %p402, %p403
      %p405 = scmp.le.s32.totalorder 1, %s25
      %p406 = scmp.lt.s32.totalorder %s25, 3
      %p407 = pnand %p405, %p406
      %p408 = pneg %p407
      // Predicated region
      $region9: #{tpu_custom_call.1} parent=5 // pred_check
        _
      $region10: #{tpu_custom_call.1} parent=5 // pred_check_branch
        %410 = sbr.rel (%p407) target = $region12
      $region11: #{tpu_custom_call.1} parent=5 // pred_region
        %s411 = ssub.s32 %s25, 1
        // Predicated region
        $region13: #{tpu_custom_call.1} parent=11 // pred_check
          %p412 = pneg %p98
        $region14: #{tpu_custom_call.1} parent=11 // pred_check_branch
          %414 = sbr.rel (%p412) target = $region16
        $region15: #{tpu_custom_call.1} parent=11 // pred_region
          _
        $region16: #{tpu_custom_call.1} parent=11 // pred_fallthru
          _
        // Predicated region
        $region17: #{tpu_custom_call.1} parent=11 // pred_check
          %p415 = pneg %p119
        $region18: #{tpu_custom_call.1} parent=11 // pred_check_branch
          %417 = sbr.rel (%p415) target = $region20
        $region19: #{tpu_custom_call.1} parent=11 // pred_region
          _
        $region20: #{tpu_custom_call.1} parent=11 // pred_fallthru
          _
        // Predicated region
        $region21: #{tpu_custom_call.1} parent=11 // pred_check
          %p418 = pneg %p140
        $region22: #{tpu_custom_call.1} parent=11 // pred_check_branch
          %420 = sbr.rel (%p418) target = $region24
        $region23: #{tpu_custom_call.1} parent=11 // pred_region
          _
        $region24: #{tpu_custom_call.1} parent=11 // pred_fallthru
          _
        // Predicated region
        $region25: #{tpu_custom_call.1} parent=11 // pred_check
          %p421 = pneg %p161
        $region26: #{tpu_custom_call.1} parent=11 // pred_check_branch
          %423 = sbr.rel (%p421) target = $region28
        $region27: #{tpu_custom_call.1} parent=11 // pred_region
          _
        $region28: #{tpu_custom_call.1} parent=11 // pred_fallthru
          _
        // Predicated region
        $region29: #{tpu_custom_call.1} parent=11 // pred_check
          %p424 = pneg %p182
        $region30: #{tpu_custom_call.1} parent=11 // pred_check_branch
          %426 = sbr.rel (%p424) target = $region32
        $region31: #{tpu_custom_call.1} parent=11 // pred_region
          _
        $region32: #{tpu_custom_call.1} parent=11 // pred_fallthru
          _
        // Predicated region
        $region33: #{tpu_custom_call.1} parent=11 // pred_check
          %p427 = pneg %p203
        $region34: #{tpu_custom_call.1} parent=11 // pred_check_branch
          %429 = sbr.rel (%p427) target = $region36
        $region35: #{tpu_custom_call.1} parent=11 // pred_region
          _
        $region36: #{tpu_custom_call.1} parent=11 // pred_fallthru
          _
        // Predicated region
        $region37: #{tpu_custom_call.1} parent=11 // pred_check
          %p430 = pneg %p224
        $region38: #{tpu_custom_call.1} parent=11 // pred_check_branch
          %432 = sbr.rel (%p430) target = $region40
        $region39: #{tpu_custom_call.1} parent=11 // pred_region
          _
        $region40: #{tpu_custom_call.1} parent=11 // pred_fallthru
          _
        // Predicated region
        $region41: #{tpu_custom_call.1} parent=11 // pred_check
          %p433 = pneg %p245
        $region42: #{tpu_custom_call.1} parent=11 // pred_check_branch
          %435 = sbr.rel (%p433) target = $region44
        $region43: #{tpu_custom_call.1} parent=11 // pred_region
          _
        $region44: #{tpu_custom_call.1} parent=11 // pred_fallthru
          _
        // Predicated region
        $region45: #{tpu_custom_call.1} parent=11 // pred_check
          %p436 = pneg %p266
        $region46: #{tpu_custom_call.1} parent=11 // pred_check_branch
          %438 = sbr.rel (%p436) target = $region48
        $region47: #{tpu_custom_call.1} parent=11 // pred_region
          _
        $region48: #{tpu_custom_call.1} parent=11 // pred_fallthru
          _
        // Predicated region
        $region49: #{tpu_custom_call.1} parent=11 // pred_check
          %p439 = pneg %p287
        $region50: #{tpu_custom_call.1} parent=11 // pred_check_branch
          %441 = sbr.rel (%p439) target = $region52
        $region51: #{tpu_custom_call.1} parent=11 // pred_region
          _
        $region52: #{tpu_custom_call.1} parent=11 // pred_fallthru
          _
        // Predicated region
        $region53: #{tpu_custom_call.1} parent=11 // pred_check
          %p442 = pneg %p308
        $region54: #{tpu_custom_call.1} parent=11 // pred_check_branch
          %444 = sbr.rel (%p442) target = $region56
        $region55: #{tpu_custom_call.1} parent=11 // pred_region
          _
        $region56: #{tpu_custom_call.1} parent=11 // pred_fallthru
          _
        // Predicated region
        $region57: #{tpu_custom_call.1} parent=11 // pred_check
          %p445 = pneg %p329
        $region58: #{tpu_custom_call.1} parent=11 // pred_check_branch
          %447 = sbr.rel (%p445) target = $region60
        $region59: #{tpu_custom_call.1} parent=11 // pred_region
          _
        $region60: #{tpu_custom_call.1} parent=11 // pred_fallthru
          _
        // Predicated region
        $region61: #{tpu_custom_call.1} parent=11 // pred_check
          %p448 = pneg %p350
        $region62: #{tpu_custom_call.1} parent=11 // pred_check_branch
          %450 = sbr.rel (%p448) target = $region64
        $region63: #{tpu_custom_call.1} parent=11 // pred_region
          _
        $region64: #{tpu_custom_call.1} parent=11 // pred_fallthru
          _
        // Predicated region
        $region65: #{tpu_custom_call.1} parent=11 // pred_check
          %p451 = pneg %p371
        $region66: #{tpu_custom_call.1} parent=11 // pred_check_branch
          %453 = sbr.rel (%p451) target = $region68
        $region67: #{tpu_custom_call.1} parent=11 // pred_region
          _
        $region68: #{tpu_custom_call.1} parent=11 // pred_fallthru
          _
      $region12: #{tpu_custom_call.1} parent=5 // pred_fallthru
        _
      %p454 = scmp.lt.s32.totalorder %s25, 2
      // Predicated region
      $region69: #{tpu_custom_call.1} parent=5 // pred_check
        %p455 = pneg %p454
      $region70: #{tpu_custom_call.1} parent=5 // pred_check_branch
        %457 = sbr.rel (%p455) target = $region72
      $region71: #{tpu_custom_call.1} parent=5 // pred_region
        // Predicated region
        $region73: #{tpu_custom_call.1} parent=71 // pred_check
          %p458 = pneg %p45
        $region74: #{tpu_custom_call.1} parent=71 // pred_check_branch
          %460 = sbr.rel (%p458) target = $region76
        $region75: #{tpu_custom_call.1} parent=71 // pred_region
          %p461 = scmp.lt.s32.totalorder %s25, 1
          %s462 = scalar_select %p461, %s25, 1
          %s463 = smul.addr %s462, 2
          %s464 = smul.addr %s463, 4
          %s465 = scalar_lea.vmem %s0, %s464
        $region76: #{tpu_custom_call.1} parent=71 // pred_fallthru
          _
        // Predicated region
        $region77: #{tpu_custom_call.1} parent=71 // pred_check
          %p466 = pneg %p71
        $region78: #{tpu_custom_call.1} parent=71 // pred_check_branch
          %468 = sbr.rel (%p466) target = $region80
        $region79: #{tpu_custom_call.1} parent=71 // pred_region
          %p469 = scmp.lt.s32.totalorder %s25, 1
          %s470 = scalar_select %p469, %s25, 1
          %s471 = smul.addr %s470, 8
          %s472 = scalar_lea.vmem %s1, %s471
        $region80: #{tpu_custom_call.1} parent=71 // pred_fallthru
          _
      $region72: #{tpu_custom_call.1} parent=5 // pred_fallthru
        _
      %p473 = scmp.le.s32.totalorder 1, %s25
      %p474 = scmp.lt.s32.totalorder %s25, 3
      %p475 = pnand %p473, %p474
      %p476 = pneg %p475
      // Predicated region
      $region81: #{tpu_custom_call.1} parent=5 // pred_check
        _
      $region82: #{tpu_custom_call.1} parent=5 // pred_check_branch
        %478 = sbr.rel (%p475) target = $region84
      $region83: #{tpu_custom_call.1} parent=5 // pred_region
        %s479 = ssub.s32 %s25, 1
        %p480 = scmp.lt.s32.totalorder %s30, 1
        %s481 = scalar_select %p480, %s30, 1
        %s482 = smul.addr %s481, 2
        %s483 = smul.addr %s482, 4
        %s484 = scalar_lea.vmem %s0, %s483
        %p485 = pneg %p51
        %p486 = pneg %p48
        %p487 = scmp.lt.s32.totalorder %s30, 1
        %s488 = scalar_select %p487, %s30, 1
        %s489 = smul.addr %s488, 8
        %s490 = scalar_lea.vmem %s1, %s489
        %p491 = pneg %p77
        %p492 = pneg %p74
        %p493 = pneg %p98
        %p494 = pneg %p95
        %p495 = pneg %p119
        %p496 = pneg %p116
        %p497 = pneg %p140
        %p498 = pneg %p137
        %p499 = pneg %p161
        %p500 = pneg %p158
        %p501 = pneg %p182
        %p502 = pneg %p179
        %p503 = pneg %p203
        %p504 = pneg %p200
        %p505 = pneg %p224
        %p506 = pneg %p221
        %p507 = pneg %p245
        %p508 = pneg %p242
        %p509 = pneg %p266
        %p510 = pneg %p263
        %p511 = pneg %p287
        %p512 = pneg %p284
        %p513 = pneg %p308
        %p514 = pneg %p305
        %p515 = pneg %p329
        %p516 = pneg %p326
        %p517 = pneg %p350
        %p518 = pneg %p347
        %p519 = pneg %p371
        %p520 = pneg %p368
        %p521 = pneg %p397
        %p522 = pneg %p394
        %s523 = sand.u32 %s384, 1
        %s524 = scalar_lea.sflag [#allocation3], %s523
        %s525 = sand.u32 %s384, 1
        %s526 = smul.addr %s525, 8
        %s527 = scalar_lea.vmem [#allocation2], %s526
        %p528 = scmp.lt.s32.totalorder %s30, 1
        %s529 = scalar_select %p528, %s30, 1
        %s530 = smul.addr %s529, 2
        %s531 = smul.addr %s530, 4
        %s532 = scalar_lea.vmem %s0, %s531
        %p533 = scmp.lt.s32.totalorder %s30, 1
        %s534 = scalar_select %p533, %s30, 1
        %s535 = smul.addr %s534, 8
        %s536 = scalar_lea.vmem %s1, %s535
        %v538 = vld [vmem:[%s532] sm:$0xf]
        %v539 = vld [vmem:[%s532 + $0x4] sm:$0x3]
        %v540 = vld [vmem:[%s536] sm:$0xff]
        %v541 = vld [vmem:[%s4] sm:$0xf]
        %v542 = vld [vmem:[%s4 + $0x4] sm:$0xf]
        %v543 = vld [vmem:[%s4 + $0x8] sm:$0xf]
        %v544 = vld [vmem:[%s4 + $0xc] sm:$0xf]
        %v545 = vld [vmem:[%s5] sm:$0x1]
        %v547 = vlaneseq
        %v548 = vshrl.u32 %v547, 7
        %v549 = vsub.s32 0, %v548
        %v550 = vrot.slane %v545, %v549
        %v554 = vunpack.c.l.b16 %v538
        %v555 = vunpack.c.l.b16 %v539
        %v556 = vpack.c.b16 %v555, %v554
        %v561 = vunpack.c.l.b16 %v541
        %v562 = vunpack.c.l.b16 %v542
        %v563 = vunpack.c.l.b16 %v543
        %v564 = vunpack.c.l.b16 %v544
        %v565 = vpack.c.b16 %v562, %v561
        %v566 = vpack.c.b16 %v564, %v563
        %vm569 = vcmask 261120
        %v571 = vsel %vm569, %v556, 0
        %573 = vmatprep.subr.bf16.mxu0 0
        %574 = vmatpush1.bf16.msra.mxu0 0
        %575 = vmatprep.subr.bf16.mxu0 0
        %576 = vmatpush1.bf16.msra.mxu0 0
        %577 = vmatprep.subr.bf16.mxu0 0
        %578 = vmatpush1.bf16.msra.mxu0 0
        %579 = vmatprep.subr.bf16.mxu0 0
        %580 = vmatpush1.bf16.msra.mxu0 0
        %581 = vmatprep.subr.bf16.mxu0 0
        %582 = vmatpush1.bf16.msra.mxu0 0
        %583 = vmatprep.subr.bf16.mxu0 0
        %584 = vmatpush1.bf16.msra.mxu0 0
        %585 = vmatprep.subr.bf16.mxu0 0
        %586 = vmatpush1.bf16.msra.mxu0 %v566
        %587 = vmatprep.subr.bf16.mxu0 0
        %588 = vmatpush1.bf16.msra.mxu0 %v565
        %589 = vmatprep.subr.bf16.mxu0 0
        %590 = vmatpush2.bf16.msra.mxu0 0
        %591 = vmatprep.subr.bf16.mxu0 0
        %592 = vmatpush2.bf16.msra.mxu0 0
        %593 = vmatprep.subr.bf16.mxu0 0
        %594 = vmatpush2.bf16.msra.mxu0 0
        %595 = vmatprep.subr.bf16.mxu0 0
        %596 = vmatpush2.bf16.msra.mxu0 0
        %597 = vmatprep.subr.bf16.mxu0 0
        %598 = vmatpush2.bf16.msra.mxu0 0
        %599 = vmatprep.subr.bf16.mxu0 0
        %600 = vmatpush2.bf16.msra.mxu0 0
        %601 = vmatprep.subr.bf16.mxu0 0
        %602 = vmatpush2.bf16.msra.mxu0 0
        %603 = vmatprep.subr.bf16.mxu0 0
        %604 = vmatpush2.bf16.msra.mxu0 0
        %605 = vmatprep.mubr.bf16.mxu0 0
        %606 = vmatmul.mubr.bf16.gmra.mxu0 %v571
        %v607 = vpop.f32.mrf.mxu0
        %v608 = vadd.f32 %v550, %v607
        %v609 = vpop.f32.mrf.mxu0
        %v610 = vpop.f32.mrf.mxu0
        %v611 = vadd.f32 %v550, %v610
        %v612 = vpop.f32.mrf.mxu0
        %613 = vdwg.mxu0
        %v614 = vpack.c.bf16 %v540, %v540
        %v615 = vld [vmem:[%s2] sm:$0xf]
        %v616 = vld [vmem:[%s2 + $0x4] sm:$0xf]
        %v617 = vld [vmem:[%s2 + $0x8] sm:$0xf]
        %v618 = vld [vmem:[%s2 + $0xc] sm:$0xf]
        %v619 = vld [vmem:[%s3] sm:$0x1]
        %v621 = vlaneseq
        %v622 = vshrl.u32 %v621, 7
        %v623 = vsub.s32 0, %v622
        %v624 = vrot.slane %v619, %v623
        %v630 = vunpack.c.l.b16 %v615
        %v631 = vunpack.c.l.b16 %v616
        %v632 = vunpack.c.l.b16 %v617
        %v633 = vunpack.c.l.b16 %v618
        %v634 = vpack.c.b16 %v631, %v630
        %v635 = vpack.c.b16 %v633, %v632
        %v639 = vsel %vm569, %v614, 0
        %641 = vmatprep.subr.bf16.mxu0 0
        %642 = vmatpush1.bf16.msra.mxu0 0
        %643 = vmatprep.subr.bf16.mxu0 0
        %644 = vmatpush1.bf16.msra.mxu0 0
        %645 = vmatprep.subr.bf16.mxu0 0
        %646 = vmatpush1.bf16.msra.mxu0 0
        %647 = vmatprep.subr.bf16.mxu0 0
        %648 = vmatpush1.bf16.msra.mxu0 0
        %649 = vmatprep.subr.bf16.mxu0 0
        %650 = vmatpush1.bf16.msra.mxu0 0
        %651 = vmatprep.subr.bf16.mxu0 0
        %652 = vmatpush1.bf16.msra.mxu0 0
        %653 = vmatprep.subr.bf16.mxu0 0
        %654 = vmatpush1.bf16.msra.mxu0 %v635
        %655 = vmatprep.subr.bf16.mxu0 0
        %656 = vmatpush1.bf16.msra.mxu0 %v634
        %657 = vmatprep.subr.bf16.mxu0 0
        %658 = vmatpush2.bf16.msra.mxu0 0
        %659 = vmatprep.subr.bf16.mxu0 0
        %660 = vmatpush2.bf16.msra.mxu0 0
        %661 = vmatprep.subr.bf16.mxu0 0
        %662 = vmatpush2.bf16.msra.mxu0 0
        %663 = vmatprep.subr.bf16.mxu0 0
        %664 = vmatpush2.bf16.msra.mxu0 0
        %665 = vmatprep.subr.bf16.mxu0 0
        %666 = vmatpush2.bf16.msra.mxu0 0
        %667 = vmatprep.subr.bf16.mxu0 0
        %668 = vmatpush2.bf16.msra.mxu0 0
        %669 = vmatprep.subr.bf16.mxu0 0
        %670 = vmatpush2.bf16.msra.mxu0 0
        %671 = vmatprep.subr.bf16.mxu0 0
        %672 = vmatpush2.bf16.msra.mxu0 0
        %673 = vmatprep.mubr.bf16.mxu0 0
        %674 = vmatmul.mubr.bf16.gmra.mxu0 %v639
        %v675 = vpop.f32.mrf.mxu0
        %v676 = vadd.f32 %v624, %v675
        %v677 = vpop.f32.mrf.mxu0
        %v678 = vpop.f32.mrf.mxu0
        %v679 = vpop.f32.mrf.mxu0
        %680 = vdwg.mxu0
        %v681 = vpack.c.bf16 %v676, %v676
        %v682 = vpack.c.bf16 %v611, %v608
        %vm683 = vcmask 64512
        %v685 = vsel %vm683, %v681, 0
        %v688 = vsel %vm683, %v682, 0
        %690 = vmatprep.subr.bf16.mxu0 0
        %691 = vmatpush1.bf16.xpose.msra.mxu0 0
        %692 = vmatprep.subr.bf16.mxu0 0
        %693 = vmatpush1.bf16.xpose.msra.mxu0 0
        %694 = vmatprep.subr.bf16.mxu0 0
        %695 = vmatpush1.bf16.xpose.msra.mxu0 0
        %696 = vmatprep.subr.bf16.mxu0 0
        %697 = vmatpush1.bf16.xpose.msra.mxu0 0
        %698 = vmatprep.subr.bf16.mxu0 0
        %699 = vmatpush1.bf16.xpose.msra.mxu0 0
        %700 = vmatprep.subr.bf16.mxu0 0
        %701 = vmatpush1.bf16.xpose.msra.mxu0 0
        %702 = vmatprep.subr.bf16.mxu0 0
        %703 = vmatpush1.bf16.xpose.msra.mxu0 0
        %704 = vmatprep.subr.bf16.mxu0 0
        %705 = vmatpush1.bf16.xpose.msra.mxu0 %v688
        %706 = vmatprep.subr.bf16.mxu0 0
        %707 = vmatpush2.bf16.xpose.msra.mxu0 0
        %708 = vmatprep.subr.bf16.mxu0 0
        %709 = vmatpush2.bf16.xpose.msra.mxu0 0
        %710 = vmatprep.subr.bf16.mxu0 0
        %711 = vmatpush2.bf16.xpose.msra.mxu0 0
        %712 = vmatprep.subr.bf16.mxu0 0
        %713 = vmatpush2.bf16.xpose.msra.mxu0 0
        %714 = vmatprep.subr.bf16.mxu0 0
        %715 = vmatpush2.bf16.xpose.msra.mxu0 0
        %716 = vmatprep.subr.bf16.mxu0 0
        %717 = vmatpush2.bf16.xpose.msra.mxu0 0
        %718 = vmatprep.subr.bf16.mxu0 0
        %719 = vmatpush2.bf16.xpose.msra.mxu0 0
        %720 = vmatprep.subr.bf16.mxu0 0
        %721 = vmatpush2.bf16.xpose.msra.mxu0 0
        %722 = vmatprep.mubr.bf16.mxu0 0
        %723 = vmatmul.mubr.bf16.gmra.mxu0 %v685
        %v724 = vpop.f32.mrf.mxu0
        %v725 = vadd.f32 0.0, %v724
        %v726 = vpop.f32.mrf.mxu0
        %v727 = vpop.f32.mrf.mxu0
        %v728 = vpop.f32.mrf.mxu0
        %729 = vdwg.mxu0
        %vm730 = vcmask 97280
        %v731 = vsel %vm730, %v725, -inf
        %732 = vmax.xlane.f32.xlu0 %v731
        %v733 = vpop.xlane.xlu0 %732
        %v734 = vsub.f32 %v725, %v733
        %v735 = vmul.f32 %v734, 1.442695
        %v736 = vpow.pop %v735
        %v737 = vsel %vm730, %v736, 0.0
        %738 = vadd.xlane.f32.xlu0 %v737
        %v739 = vpop.xlane.xlu0 %738
        %v740 = vrcp.pop %v739
        %v741 = vmul.f32 %v736, %v740
        %v742 = vpack.c.bf16 %v741, %v741
        %744 = vrot.lane.b32.xlu0 %v682, 96
        %v745 = vpop.permute.xlu0 %744
        %v747 = vsel %vm730, %v742, 0
        %vm749 = vcmask 1045504
        %v751 = vsel %vm749, %v745, 0
        %753 = vmatprep.subr.bf16.mxu0 0
        %754 = vmatpush1.bf16.msra.mxu0 0
        %755 = vmatprep.subr.bf16.mxu0 0
        %756 = vmatpush1.bf16.msra.mxu0 0
        %757 = vmatprep.subr.bf16.mxu0 0
        %758 = vmatpush1.bf16.msra.mxu0 0
        %759 = vmatprep.subr.bf16.mxu0 0
        %760 = vmatpush1.bf16.msra.mxu0 0
        %761 = vmatprep.subr.bf16.mxu0 0
        %762 = vmatpush1.bf16.msra.mxu0 0
        %763 = vmatprep.subr.bf16.mxu0 0
        %764 = vmatpush1.bf16.msra.mxu0 0
        %765 = vmatprep.subr.bf16.mxu0 0
        %766 = vmatpush1.bf16.msra.mxu0 0
        %767 = vmatprep.subr.bf16.mxu0 0
        %768 = vmatpush1.bf16.msra.mxu0 %v751
        %769 = vmatprep.subr.bf16.mxu0 0
        %770 = vmatpush2.bf16.msra.mxu0 0
        %771 = vmatprep.subr.bf16.mxu0 0
        %772 = vmatpush2.bf16.msra.mxu0 0
        %773 = vmatprep.subr.bf16.mxu0 0
        %774 = vmatpush2.bf16.msra.mxu0 0
        %775 = vmatprep.subr.bf16.mxu0 0
        %776 = vmatpush2.bf16.msra.mxu0 0
        %777 = vmatprep.subr.bf16.mxu0 0
        %778 = vmatpush2.bf16.msra.mxu0 0
        %779 = vmatprep.subr.bf16.mxu0 0
        %780 = vmatpush2.bf16.msra.mxu0 0
        %781 = vmatprep.subr.bf16.mxu0 0
        %782 = vmatpush2.bf16.msra.mxu0 0
        %783 = vmatprep.subr.bf16.mxu0 0
        %784 = vmatpush2.bf16.msra.mxu0 0
        %785 = vmatprep.mubr.bf16.mxu0 0
        %786 = vmatmul.mubr.bf16.gmra.mxu0 %v747
        %v787 = vpop.f32.mrf.mxu0
        %v788 = vadd.f32 0.0, %v787
        %v789 = vpop.f32.mrf.mxu0
        %v790 = vpop.f32.mrf.mxu0
        %v791 = vpop.f32.mrf.mxu0
        %792 = vdwg.mxu0
        %794 = vrot.lane.b32.xlu0 %v681, 120
        %v795 = vpop.permute.xlu0 %794
        %796 = vrot.lane.b32.xlu0 %v682, 120
        %v797 = vpop.permute.xlu0 %796
        %v799 = vsel %vm683, %v795, 0
        %v802 = vsel %vm683, %v797, 0
        %804 = vmatprep.subr.bf16.mxu0 0
        %805 = vmatpush1.bf16.xpose.msra.mxu0 0
        %806 = vmatprep.subr.bf16.mxu0 0
        %807 = vmatpush1.bf16.xpose.msra.mxu0 0
        %808 = vmatprep.subr.bf16.mxu0 0
        %809 = vmatpush1.bf16.xpose.msra.mxu0 0
        %810 = vmatprep.subr.bf16.mxu0 0
        %811 = vmatpush1.bf16.xpose.msra.mxu0 0
        %812 = vmatprep.subr.bf16.mxu0 0
        %813 = vmatpush1.bf16.xpose.msra.mxu0 0
        %814 = vmatprep.subr.bf16.mxu0 0
        %815 = vmatpush1.bf16.xpose.msra.mxu0 0
        %816 = vmatprep.subr.bf16.mxu0 0
        %817 = vmatpush1.bf16.xpose.msra.mxu0 0
        %818 = vmatprep.subr.bf16.mxu0 0
        %819 = vmatpush1.bf16.xpose.msra.mxu0 %v802
        %820 = vmatprep.subr.bf16.mxu0 0
        %821 = vmatpush2.bf16.xpose.msra.mxu0 0
        %822 = vmatprep.subr.bf16.mxu0 0
        %823 = vmatpush2.bf16.xpose.msra.mxu0 0
        %824 = vmatprep.subr.bf16.mxu0 0
        %825 = vmatpush2.bf16.xpose.msra.mxu0 0
        %826 = vmatprep.subr.bf16.mxu0 0
        %827 = vmatpush2.bf16.xpose.msra.mxu0 0
        %828 = vmatprep.subr.bf16.mxu0 0
        %829 = vmatpush2.bf16.xpose.msra.mxu0 0
        %830 = vmatprep.subr.bf16.mxu0 0
        %831 = vmatpush2.bf16.xpose.msra.mxu0 0
        %832 = vmatprep.subr.bf16.mxu0 0
        %833 = vmatpush2.bf16.xpose.msra.mxu0 0
        %834 = vmatprep.subr.bf16.mxu0 0
        %835 = vmatpush2.bf16.xpose.msra.mxu0 0
        %836 = vmatprep.mubr.bf16.mxu0 0
        %837 = vmatmul.mubr.bf16.gmra.mxu0 %v799
        %v838 = vpop.f32.mrf.mxu0
        %v839 = vadd.f32 0.0, %v838
        %v840 = vpop.f32.mrf.mxu0
        %v841 = vpop.f32.mrf.mxu0
        %v842 = vpop.f32.mrf.mxu0
        %843 = vdwg.mxu0
        %v844 = vsel %vm730, %v839, -inf
        %845 = vmax.xlane.f32.xlu0 %v844
        %v846 = vpop.xlane.xlu0 %845
        %v847 = vsub.f32 %v839, %v846
        %v848 = vmul.f32 %v847, 1.442695
        %v849 = vpow.pop %v848
        %v850 = vsel %vm730, %v849, 0.0
        %851 = vadd.xlane.f32.xlu0 %v850
        %v852 = vpop.xlane.xlu0 %851
        %v853 = vrcp.pop %v852
        %v854 = vmul.f32 %v849, %v853
        %v855 = vpack.c.bf16 %v854, %v854
        %856 = vrot.lane.b32.xlu0 %v682, 88
        %v857 = vpop.permute.xlu0 %856
        %v859 = vsel %vm730, %v855, 0
        %v862 = vsel %vm749, %v857, 0
        %864 = vmatprep.subr.bf16.mxu0 0
        %865 = vmatpush1.bf16.msra.mxu0 0
        %866 = vmatprep.subr.bf16.mxu0 0
        %867 = vmatpush1.bf16.msra.mxu0 0
        %868 = vmatprep.subr.bf16.mxu0 0
        %869 = vmatpush1.bf16.msra.mxu0 0
        %870 = vmatprep.subr.bf16.mxu0 0
        %871 = vmatpush1.bf16.msra.mxu0 0
        %872 = vmatprep.subr.bf16.mxu0 0
        %873 = vmatpush1.bf16.msra.mxu0 0
        %874 = vmatprep.subr.bf16.mxu0 0
        %875 = vmatpush1.bf16.msra.mxu0 0
        %876 = vmatprep.subr.bf16.mxu0 0
        %877 = vmatpush1.bf16.msra.mxu0 0
        %878 = vmatprep.subr.bf16.mxu0 0
        %879 = vmatpush1.bf16.msra.mxu0 %v862
        %880 = vmatprep.subr.bf16.mxu0 0
        %881 = vmatpush2.bf16.msra.mxu0 0
        %882 = vmatprep.subr.bf16.mxu0 0
        %883 = vmatpush2.bf16.msra.mxu0 0
        %884 = vmatprep.subr.bf16.mxu0 0
        %885 = vmatpush2.bf16.msra.mxu0 0
        %886 = vmatprep.subr.bf16.mxu0 0
        %887 = vmatpush2.bf16.msra.mxu0 0
        %888 = vmatprep.subr.bf16.mxu0 0
        %889 = vmatpush2.bf16.msra.mxu0 0
        %890 = vmatprep.subr.bf16.mxu0 0
        %891 = vmatpush2.bf16.msra.mxu0 0
        %892 = vmatprep.subr.bf16.mxu0 0
        %893 = vmatpush2.bf16.msra.mxu0 0
        %894 = vmatprep.subr.bf16.mxu0 0
        %895 = vmatpush2.bf16.msra.mxu0 0
        %896 = vmatprep.mubr.bf16.mxu0 0
        %897 = vmatmul.mubr.bf16.gmra.mxu0 %v859
        %v898 = vpop.f32.mrf.mxu0
        %v899 = vadd.f32 0.0, %v898
        %v900 = vpop.f32.mrf.mxu0
        %v901 = vpop.f32.mrf.mxu0
        %v902 = vpop.f32.mrf.mxu0
        %903 = vdwg.mxu0
        %904 = vrot.lane.b32.xlu0 %v681, 112
        %v905 = vpop.permute.xlu0 %904
        %906 = vrot.lane.b32.xlu0 %v682, 112
        %v907 = vpop.permute.xlu0 %906
        %v909 = vsel %vm683, %v905, 0
        %v912 = vsel %vm683, %v907, 0
        %914 = vmatprep.subr.bf16.mxu0 0
        %915 = vmatpush1.bf16.xpose.msra.mxu0 0
        %916 = vmatprep.subr.bf16.mxu0 0
        %917 = vmatpush1.bf16.xpose.msra.mxu0 0
        %918 = vmatprep.subr.bf16.mxu0 0
        %919 = vmatpush1.bf16.xpose.msra.mxu0 0
        %920 = vmatprep.subr.bf16.mxu0 0
        %921 = vmatpush1.bf16.xpose.msra.mxu0 0
        %922 = vmatprep.subr.bf16.mxu0 0
        %923 = vmatpush1.bf16.xpose.msra.mxu0 0
        %924 = vmatprep.subr.bf16.mxu0 0
        %925 = vmatpush1.bf16.xpose.msra.mxu0 0
        %926 = vmatprep.subr.bf16.mxu0 0
        %927 = vmatpush1.bf16.xpose.msra.mxu0 0
        %928 = vmatprep.subr.bf16.mxu0 0
        %929 = vmatpush1.bf16.xpose.msra.mxu0 %v912
        %930 = vmatprep.subr.bf16.mxu0 0
        %931 = vmatpush2.bf16.xpose.msra.mxu0 0
        %932 = vmatprep.subr.bf16.mxu0 0
        %933 = vmatpush2.bf16.xpose.msra.mxu0 0
        %934 = vmatprep.subr.bf16.mxu0 0
        %935 = vmatpush2.bf16.xpose.msra.mxu0 0
        %936 = vmatprep.subr.bf16.mxu0 0
        %937 = vmatpush2.bf16.xpose.msra.mxu0 0
        %938 = vmatprep.subr.bf16.mxu0 0
        %939 = vmatpush2.bf16.xpose.msra.mxu0 0
        %940 = vmatprep.subr.bf16.mxu0 0
        %941 = vmatpush2.bf16.xpose.msra.mxu0 0
        %942 = vmatprep.subr.bf16.mxu0 0
        %943 = vmatpush2.bf16.xpose.msra.mxu0 0
        %944 = vmatprep.subr.bf16.mxu0 0
        %945 = vmatpush2.bf16.xpose.msra.mxu0 0
        %946 = vmatprep.mubr.bf16.mxu0 0
        %947 = vmatmul.mubr.bf16.gmra.mxu0 %v909
        %v948 = vpop.f32.mrf.mxu0
        %v949 = vadd.f32 0.0, %v948
        %v950 = vpop.f32.mrf.mxu0
        %v951 = vpop.f32.mrf.mxu0
        %v952 = vpop.f32.mrf.mxu0
        %953 = vdwg.mxu0
        %v954 = vsel %vm730, %v949, -inf
        %955 = vmax.xlane.f32.xlu0 %v954
        %v956 = vpop.xlane.xlu0 %955
        %v957 = vsub.f32 %v949, %v956
        %v958 = vmul.f32 %v957, 1.442695
        %v959 = vpow.pop %v958
        %v960 = vsel %vm730, %v959, 0.0
        %961 = vadd.xlane.f32.xlu0 %v960
        %v962 = vpop.xlane.xlu0 %961
        %v963 = vrcp.pop %v962
        %v964 = vmul.f32 %v959, %v963
        %v965 = vpack.c.bf16 %v964, %v964
        %966 = vrot.lane.b32.xlu0 %v682, 80
        %v967 = vpop.permute.xlu0 %966
        %v969 = vsel %vm730, %v965, 0
        %v972 = vsel %vm749, %v967, 0
        %974 = vmatprep.subr.bf16.mxu0 0
        %975 = vmatpush1.bf16.msra.mxu0 0
        %976 = vmatprep.subr.bf16.mxu0 0
        %977 = vmatpush1.bf16.msra.mxu0 0
        %978 = vmatprep.subr.bf16.mxu0 0
        %979 = vmatpush1.bf16.msra.mxu0 0
        %980 = vmatprep.subr.bf16.mxu0 0
        %981 = vmatpush1.bf16.msra.mxu0 0
        %982 = vmatprep.subr.bf16.mxu0 0
        %983 = vmatpush1.bf16.msra.mxu0 0
        %984 = vmatprep.subr.bf16.mxu0 0
        %985 = vmatpush1.bf16.msra.mxu0 0
        %986 = vmatprep.subr.bf16.mxu0 0
        %987 = vmatpush1.bf16.msra.mxu0 0
        %988 = vmatprep.subr.bf16.mxu0 0
        %989 = vmatpush1.bf16.msra.mxu0 %v972
        %990 = vmatprep.subr.bf16.mxu0 0
        %991 = vmatpush2.bf16.msra.mxu0 0
        %992 = vmatprep.subr.bf16.mxu0 0
        %993 = vmatpush2.bf16.msra.mxu0 0
        %994 = vmatprep.subr.bf16.mxu0 0
        %995 = vmatpush2.bf16.msra.mxu0 0
        %996 = vmatprep.subr.bf16.mxu0 0
        %997 = vmatpush2.bf16.msra.mxu0 0
        %998 = vmatprep.subr.bf16.mxu0 0
        %999 = vmatpush2.bf16.msra.mxu0 0
        %1000 = vmatprep.subr.bf16.mxu0 0
        %1001 = vmatpush2.bf16.msra.mxu0 0
        %1002 = vmatprep.subr.bf16.mxu0 0
        %1003 = vmatpush2.bf16.msra.mxu0 0
        %1004 = vmatprep.subr.bf16.mxu0 0
        %1005 = vmatpush2.bf16.msra.mxu0 0
        %1006 = vmatprep.mubr.bf16.mxu0 0
        %1007 = vmatmul.mubr.bf16.gmra.mxu0 %v969
        %v1008 = vpop.f32.mrf.mxu0
        %v1009 = vadd.f32 0.0, %v1008
        %v1010 = vpop.f32.mrf.mxu0
        %v1011 = vpop.f32.mrf.mxu0
        %v1012 = vpop.f32.mrf.mxu0
        %1013 = vdwg.mxu0
        %1014 = vrot.lane.b32.xlu0 %v681, 104
        %v1015 = vpop.permute.xlu0 %1014
        %1016 = vrot.lane.b32.xlu0 %v682, 104
        %v1017 = vpop.permute.xlu0 %1016
        %v1019 = vsel %vm683, %v1015, 0
        %v1022 = vsel %vm683, %v1017, 0
        %1024 = vmatprep.subr.bf16.mxu0 0
        %1025 = vmatpush1.bf16.xpose.msra.mxu0 0
        %1026 = vmatprep.subr.bf16.mxu0 0
        %1027 = vmatpush1.bf16.xpose.msra.mxu0 0
        %1028 = vmatprep.subr.bf16.mxu0 0
        %1029 = vmatpush1.bf16.xpose.msra.mxu0 0
        %1030 = vmatprep.subr.bf16.mxu0 0
        %1031 = vmatpush1.bf16.xpose.msra.mxu0 0
        %1032 = vmatprep.subr.bf16.mxu0 0
        %1033 = vmatpush1.bf16.xpose.msra.mxu0 0
        %1034 = vmatprep.subr.bf16.mxu0 0
        %1035 = vmatpush1.bf16.xpose.msra.mxu0 0
        %1036 = vmatprep.subr.bf16.mxu0 0
        %1037 = vmatpush1.bf16.xpose.msra.mxu0 0
        %1038 = vmatprep.subr.bf16.mxu0 0
        %1039 = vmatpush1.bf16.xpose.msra.mxu0 %v1022
        %1040 = vmatprep.subr.bf16.mxu0 0
        %1041 = vmatpush2.bf16.xpose.msra.mxu0 0
        %1042 = vmatprep.subr.bf16.mxu0 0
        %1043 = vmatpush2.bf16.xpose.msra.mxu0 0
        %1044 = vmatprep.subr.bf16.mxu0 0
        %1045 = vmatpush2.bf16.xpose.msra.mxu0 0
        %1046 = vmatprep.subr.bf16.mxu0 0
        %1047 = vmatpush2.bf16.xpose.msra.mxu0 0
        %1048 = vmatprep.subr.bf16.mxu0 0
        %1049 = vmatpush2.bf16.xpose.msra.mxu0 0
        %1050 = vmatprep.subr.bf16.mxu0 0
        %1051 = vmatpush2.bf16.xpose.msra.mxu0 0
        %1052 = vmatprep.subr.bf16.mxu0 0
        %1053 = vmatpush2.bf16.xpose.msra.mxu0 0
        %1054 = vmatprep.subr.bf16.mxu0 0
        %1055 = vmatpush2.bf16.xpose.msra.mxu0 0
        %1056 = vmatprep.mubr.bf16.mxu0 0
        %1057 = vmatmul.mubr.bf16.gmra.mxu0 %v1019
        %v1058 = vpop.f32.mrf.mxu0
        %v1059 = vadd.f32 0.0, %v1058
        %v1060 = vpop.f32.mrf.mxu0
        %v1061 = vpop.f32.mrf.mxu0
        %v1062 = vpop.f32.mrf.mxu0
        %1063 = vdwg.mxu0
        %v1064 = vsel %vm730, %v1059, -inf
        %1065 = vmax.xlane.f32.xlu0 %v1064
        %v1066 = vpop.xlane.xlu0 %1065
        %v1067 = vsub.f32 %v1059, %v1066
        %v1068 = vmul.f32 %v1067, 1.442695
        %v1069 = vpow.pop %v1068
        %v1070 = vsel %vm730, %v1069, 0.0
        %1071 = vadd.xlane.f32.xlu0 %v1070
        %v1072 = vpop.xlane.xlu0 %1071
        %v1073 = vrcp.pop %v1072
        %v1074 = vmul.f32 %v1069, %v1073
        %v1075 = vpack.c.bf16 %v1074, %v1074
        %1076 = vrot.lane.b32.xlu0 %v682, 72
        %v1077 = vpop.permute.xlu0 %1076
        %v1079 = vsel %vm730, %v1075, 0
        %v1082 = vsel %vm749, %v1077, 0
        %1084 = vmatprep.subr.bf16.mxu0 0
        %1085 = vmatpush1.bf16.msra.mxu0 0
        %1086 = vmatprep.subr.bf16.mxu0 0
        %1087 = vmatpush1.bf16.msra.mxu0 0
        %1088 = vmatprep.subr.bf16.mxu0 0
        %1089 = vmatpush1.bf16.msra.mxu0 0
        %1090 = vmatprep.subr.bf16.mxu0 0
        %1091 = vmatpush1.bf16.msra.mxu0 0
        %1092 = vmatprep.subr.bf16.mxu0 0
        %1093 = vmatpush1.bf16.msra.mxu0 0
        %1094 = vmatprep.subr.bf16.mxu0 0
        %1095 = vmatpush1.bf16.msra.mxu0 0
        %1096 = vmatprep.subr.bf16.mxu0 0
        %1097 = vmatpush1.bf16.msra.mxu0 0
        %1098 = vmatprep.subr.bf16.mxu0 0
        %1099 = vmatpush1.bf16.msra.mxu0 %v1082
        %1100 = vmatprep.subr.bf16.mxu0 0
        %1101 = vmatpush2.bf16.msra.mxu0 0
        %1102 = vmatprep.subr.bf16.mxu0 0
        %1103 = vmatpush2.bf16.msra.mxu0 0
        %1104 = vmatprep.subr.bf16.mxu0 0
        %1105 = vmatpush2.bf16.msra.mxu0 0
        %1106 = vmatprep.subr.bf16.mxu0 0
        %1107 = vmatpush2.bf16.msra.mxu0 0
        %1108 = vmatprep.subr.bf16.mxu0 0
        %1109 = vmatpush2.bf16.msra.mxu0 0
        %1110 = vmatprep.subr.bf16.mxu0 0
        %1111 = vmatpush2.bf16.msra.mxu0 0
        %1112 = vmatprep.subr.bf16.mxu0 0
        %1113 = vmatpush2.bf16.msra.mxu0 0
        %1114 = vmatprep.subr.bf16.mxu0 0
        %1115 = vmatpush2.bf16.msra.mxu0 0
        %1116 = vmatprep.mubr.bf16.mxu0 0
        %1117 = vmatmul.mubr.bf16.gmra.mxu0 %v1079
        %v1118 = vpop.f32.mrf.mxu0
        %v1119 = vadd.f32 0.0, %v1118
        %v1120 = vpop.f32.mrf.mxu0
        %v1121 = vpop.f32.mrf.mxu0
        %v1122 = vpop.f32.mrf.mxu0
        %1123 = vdwg.mxu0
        %1125 = vrot.lane.b32.xlu0 %v899, 8
        %v1126 = vpop.permute.xlu0 %1125
        %1129 = vrot.lane.b32.xlu0 %v1009, 16
        %v1130 = vpop.permute.xlu0 %1129
        %1133 = vrot.lane.b32.xlu0 %v1119, 24
        %v1134 = vpop.permute.xlu0 %1133
        %v1136 = vsel %vm683, %v788, %v1126
        %vm1137 = vcmask 130048
        %v1138 = vsel %vm1137, %v1136, %v1130
        %vm1139 = vcmask 195584
        %v1140 = vsel %vm1139, %v1138, %v1134
        %v1141 = vpack.c.bf16 %v1140, %v1140
        %v1142 = vld [vmem:[%s6] sm:$0xf]
        %v1143 = vld [vmem:[%s6 + $0x4] sm:$0xf]
        %v1144 = vld [vmem:[%s6 + $0x8] sm:$0xf]
        %v1145 = vld [vmem:[%s6 + $0xc] sm:$0xf]
        %v1146 = vld [vmem:[%s7] sm:$0x1]
        %v1148 = vlaneseq
        %v1149 = vshrl.u32 %v1148, 7
        %v1150 = vsub.s32 0, %v1149
        %v1151 = vrot.slane %v1146, %v1150
        %v1157 = vunpack.c.l.b16 %v1142
        %v1158 = vunpack.c.l.b16 %v1143
        %v1159 = vunpack.c.l.b16 %v1144
        %v1160 = vunpack.c.l.b16 %v1145
        %v1161 = vpack.c.b16 %v1158, %v1157
        %v1162 = vpack.c.b16 %v1160, %v1159
        %v1166 = vsel %vm569, %v1141, 0
        %1168 = vmatprep.subr.bf16.mxu0 0
        %1169 = vmatpush1.bf16.msra.mxu0 0
        %1170 = vmatprep.subr.bf16.mxu0 0
        %1171 = vmatpush1.bf16.msra.mxu0 0
        %1172 = vmatprep.subr.bf16.mxu0 0
        %1173 = vmatpush1.bf16.msra.mxu0 0
        %1174 = vmatprep.subr.bf16.mxu0 0
        %1175 = vmatpush1.bf16.msra.mxu0 0
        %1176 = vmatprep.subr.bf16.mxu0 0
        %1177 = vmatpush1.bf16.msra.mxu0 0
        %1178 = vmatprep.subr.bf16.mxu0 0
        %1179 = vmatpush1.bf16.msra.mxu0 0
        %1180 = vmatprep.subr.bf16.mxu0 0
        %1181 = vmatpush1.bf16.msra.mxu0 %v1162
        %1182 = vmatprep.subr.bf16.mxu0 0
        %1183 = vmatpush1.bf16.msra.mxu0 %v1161
        %1184 = vmatprep.subr.bf16.mxu0 0
        %1185 = vmatpush2.bf16.msra.mxu0 0
        %1186 = vmatprep.subr.bf16.mxu0 0
        %1187 = vmatpush2.bf16.msra.mxu0 0
        %1188 = vmatprep.subr.bf16.mxu0 0
        %1189 = vmatpush2.bf16.msra.mxu0 0
        %1190 = vmatprep.subr.bf16.mxu0 0
        %1191 = vmatpush2.bf16.msra.mxu0 0
        %1192 = vmatprep.subr.bf16.mxu0 0
        %1193 = vmatpush2.bf16.msra.mxu0 0
        %1194 = vmatprep.subr.bf16.mxu0 0
        %1195 = vmatpush2.bf16.msra.mxu0 0
        %1196 = vmatprep.subr.bf16.mxu0 0
        %1197 = vmatpush2.bf16.msra.mxu0 0
        %1198 = vmatprep.subr.bf16.mxu0 0
        %1199 = vmatpush2.bf16.msra.mxu0 0
        %1200 = vmatprep.mubr.bf16.mxu0 0
        %1201 = vmatmul.mubr.bf16.gmra.mxu0 %v1166
        %v1202 = vpop.f32.mrf.mxu0
        %v1203 = vadd.f32 %v1151, %v1202
        %v1204 = vpop.f32.mrf.mxu0
        %v1205 = vpop.f32.mrf.mxu0
        %v1206 = vpop.f32.mrf.mxu0
        %1207 = vdwg.mxu0
        %v1208 = vadd.f32 %v540, %v1203
        %v1209 = vld [vmem:[%s8] sm:$0x1]
        %v1210 = vld [vmem:[%s9] sm:$0x1]
        %v1211 = vsel %vm569, %v1208, 0.0
        %1212 = vadd.xlane.f32.xlu0 %v1211
        %v1213 = vpop.xlane.xlu0 %1212
        %v1214 = vrcp.pop 32.0
        %v1215 = vmul.f32 %v1213, %v1214
        %v1216 = vsub.f32 %v1208, %v1215
        %v1217 = vmul.f32 %v1216, %v1216
        %v1218 = vsel %vm569, %v1217, 0.0
        %1219 = vadd.xlane.f32.xlu0 %v1218
        %v1220 = vpop.xlane.xlu0 %1219
        %v1221 = vmul.f32 %v1220, %v1214
        %v1222 = vadd.f32 %v1221, 1e-05
        %v1223 = vrsqrt.pop %v1222
        %v1224 = vmul.f32 %v1216, %v1223
        %v1226 = vlaneseq
        %v1227 = vshrl.u32 %v1226, 7
        %v1228 = vsub.s32 0, %v1227
        %v1229 = vrot.slane %v1209, %v1228
        %v1231 = vmul.f32 %v1224, %v1229
        %v1233 = vlaneseq
        %v1234 = vshrl.u32 %v1233, 7
        %v1235 = vsub.s32 0, %v1234
        %v1236 = vrot.slane %v1210, %v1235
        %v1238 = vadd.f32 %v1231, %v1236
        %v1239 = vpack.c.bf16 %v1238, %v1238
        %v1240 = vld [vmem:[%s10] sm:$0xf]
        %v1241 = vld [vmem:[%s10 + $0x4] sm:$0xf]
        %v1242 = vld [vmem:[%s10 + $0x8] sm:$0xf]
        %v1243 = vld [vmem:[%s10 + $0xc] sm:$0xf]
        %v1244 = vld [vmem:[%s11] sm:$0x1]
        %v1246 = vlaneseq
        %v1247 = vshrl.u32 %v1246, 7
        %v1248 = vsub.s32 0, %v1247
        %v1249 = vrot.slane %v1244, %v1248
        %v1255 = vunpack.c.l.b16 %v1240
        %v1256 = vunpack.c.l.b16 %v1241
        %v1257 = vunpack.c.l.b16 %v1242
        %v1258 = vunpack.c.l.b16 %v1243
        %v1259 = vpack.c.b16 %v1256, %v1255
        %v1260 = vpack.c.b16 %v1258, %v1257
        %v1264 = vsel %vm569, %v1239, 0
        %1266 = vmatprep.subr.bf16.mxu0 0
        %1267 = vmatpush1.bf16.msra.mxu0 0
        %1268 = vmatprep.subr.bf16.mxu0 0
        %1269 = vmatpush1.bf16.msra.mxu0 0
        %1270 = vmatprep.subr.bf16.mxu0 0
        %1271 = vmatpush1.bf16.msra.mxu0 0
        %1272 = vmatprep.subr.bf16.mxu0 0
        %1273 = vmatpush1.bf16.msra.mxu0 0
        %1274 = vmatprep.subr.bf16.mxu0 0
        %1275 = vmatpush1.bf16.msra.mxu0 0
        %1276 = vmatprep.subr.bf16.mxu0 0
        %1277 = vmatpush1.bf16.msra.mxu0 0
        %1278 = vmatprep.subr.bf16.mxu0 0
        %1279 = vmatpush1.bf16.msra.mxu0 %v1260
        %1280 = vmatprep.subr.bf16.mxu0 0
        %1281 = vmatpush1.bf16.msra.mxu0 %v1259
        %1282 = vmatprep.subr.bf16.mxu0 0
        %1283 = vmatpush2.bf16.msra.mxu0 0
        %1284 = vmatprep.subr.bf16.mxu0 0
        %1285 = vmatpush2.bf16.msra.mxu0 0
        %1286 = vmatprep.subr.bf16.mxu0 0
        %1287 = vmatpush2.bf16.msra.mxu0 0
        %1288 = vmatprep.subr.bf16.mxu0 0
        %1289 = vmatpush2.bf16.msra.mxu0 0
        %1290 = vmatprep.subr.bf16.mxu0 0
        %1291 = vmatpush2.bf16.msra.mxu0 0
        %1292 = vmatprep.subr.bf16.mxu0 0
        %1293 = vmatpush2.bf16.msra.mxu0 0
        %1294 = vmatprep.subr.bf16.mxu0 0
        %1295 = vmatpush2.bf16.msra.mxu0 0
        %1296 = vmatprep.subr.bf16.mxu0 0
        %1297 = vmatpush2.bf16.msra.mxu0 0
        %1298 = vmatprep.mubr.bf16.mxu0 0
        %1299 = vmatmul.mubr.bf16.gmra.mxu0 %v1264
        %v1300 = vpop.f32.mrf.mxu0
        %v1301 = vadd.f32 %v1249, %v1300
        %v1302 = vpop.f32.mrf.mxu0
        %v1303 = vpop.f32.mrf.mxu0
        %v1304 = vpop.f32.mrf.mxu0
        %1305 = vdwg.mxu0
        %v1306 = vmul.f32 %v1301, 0.5
        %v1307 = vmul.f32 %v1301, 0.70710677
        %v1308 = verf.f32.pop %v1307
        %v1309 = vadd.f32 %v1308, 1.0
        %v1310 = vmul.f32 %v1306, %v1309
        %v1311 = vpack.c.bf16 %v1310, %v1310
        %v1312 = vld [vmem:[%s12] sm:$0xf]
        %v1313 = vld [vmem:[%s12 + $0x4] sm:$0xf]
        %v1314 = vld [vmem:[%s12 + $0x8] sm:$0xf]
        %v1315 = vld [vmem:[%s12 + $0xc] sm:$0xf]
        %v1316 = vld [vmem:[%s12 + $0x10] sm:$0xf]
        %v1317 = vld [vmem:[%s12 + $0x14] sm:$0xf]
        %v1318 = vld [vmem:[%s12 + $0x18] sm:$0xf]
        %v1319 = vld [vmem:[%s12 + $0x1c] sm:$0xf]
        %v1320 = vld [vmem:[%s12 + $0x20] sm:$0xf]
        %v1321 = vld [vmem:[%s12 + $0x24] sm:$0xf]
        %v1322 = vld [vmem:[%s12 + $0x28] sm:$0xf]
        %v1323 = vld [vmem:[%s12 + $0x2c] sm:$0xf]
        %v1324 = vld [vmem:[%s12 + $0x30] sm:$0xf]
        %v1325 = vld [vmem:[%s12 + $0x34] sm:$0xf]
        %v1326 = vld [vmem:[%s12 + $0x38] sm:$0xf]
        %v1327 = vld [vmem:[%s12 + $0x3c] sm:$0xf]
        %v1328 = vld [vmem:[%s13] sm:$0x1]
        %v1330 = vlaneseq
        %v1331 = vshrl.u32 %v1330, 7
        %v1332 = vsub.s32 0, %v1331
        %v1333 = vrot.slane %v1328, %v1332
        %v1351 = vunpack.c.l.b16 %v1312
        %v1352 = vunpack.c.l.b16 %v1313
        %v1353 = vunpack.c.l.b16 %v1314
        %v1354 = vunpack.c.l.b16 %v1315
        %v1355 = vunpack.c.l.b16 %v1316
        %v1356 = vunpack.c.l.b16 %v1317
        %v1357 = vunpack.c.l.b16 %v1318
        %v1358 = vunpack.c.l.b16 %v1319
        %v1359 = vunpack.c.l.b16 %v1320
        %v1360 = vunpack.c.l.b16 %v1321
        %v1361 = vunpack.c.l.b16 %v1322
        %v1362 = vunpack.c.l.b16 %v1323
        %v1363 = vunpack.c.l.b16 %v1324
        %v1364 = vunpack.c.l.b16 %v1325
        %v1365 = vunpack.c.l.b16 %v1326
        %v1366 = vunpack.c.l.b16 %v1327
        %v1367 = vpack.c.b16 %v1352, %v1351
        %v1368 = vpack.c.b16 %v1354, %v1353
        %v1369 = vpack.c.b16 %v1356, %v1355
        %v1370 = vpack.c.b16 %v1358, %v1357
        %v1371 = vpack.c.b16 %v1360, %v1359
        %v1372 = vpack.c.b16 %v1362, %v1361
        %v1373 = vpack.c.b16 %v1364, %v1363
        %v1374 = vpack.c.b16 %v1366, %v1365
        %1383 = vmatprep.subr.bf16.mxu0 0
        %1384 = vmatpush1.bf16.msra.mxu0 %v1374
        %1385 = vmatprep.subr.bf16.mxu0 0
        %1386 = vmatpush1.bf16.msra.mxu0 %v1373
        %1387 = vmatprep.subr.bf16.mxu0 0
        %1388 = vmatpush1.bf16.msra.mxu0 %v1372
        %1389 = vmatprep.subr.bf16.mxu0 0
        %1390 = vmatpush1.bf16.msra.mxu0 %v1371
        %1391 = vmatprep.subr.bf16.mxu0 0
        %1392 = vmatpush1.bf16.msra.mxu0 %v1370
        %1393 = vmatprep.subr.bf16.mxu0 0
        %1394 = vmatpush1.bf16.msra.mxu0 %v1369
        %1395 = vmatprep.subr.bf16.mxu0 0
        %1396 = vmatpush1.bf16.msra.mxu0 %v1368
        %1397 = vmatprep.subr.bf16.mxu0 0
        %1398 = vmatpush1.bf16.msra.mxu0 %v1367
        %1399 = vmatprep.subr.bf16.mxu0 0
        %1400 = vmatpush2.bf16.msra.mxu0 0
        %1401 = vmatprep.subr.bf16.mxu0 0
        %1402 = vmatpush2.bf16.msra.mxu0 0
        %1403 = vmatprep.subr.bf16.mxu0 0
        %1404 = vmatpush2.bf16.msra.mxu0 0
        %1405 = vmatprep.subr.bf16.mxu0 0
        %1406 = vmatpush2.bf16.msra.mxu0 0
        %1407 = vmatprep.subr.bf16.mxu0 0
        %1408 = vmatpush2.bf16.msra.mxu0 0
        %1409 = vmatprep.subr.bf16.mxu0 0
        %1410 = vmatpush2.bf16.msra.mxu0 0
        %1411 = vmatprep.subr.bf16.mxu0 0
        %1412 = vmatpush2.bf16.msra.mxu0 0
        %1413 = vmatprep.subr.bf16.mxu0 0
        %1414 = vmatpush2.bf16.msra.mxu0 0
        %1415 = vmatprep.mubr.bf16.mxu0 0
        %1416 = vmatmul.mubr.bf16.gmra.mxu0 %v1311
        %v1417 = vpop.f32.mrf.mxu0
        %v1418 = vadd.f32 %v1333, %v1417
        %v1419 = vpop.f32.mrf.mxu0
        %v1420 = vpop.f32.mrf.mxu0
        %v1421 = vpop.f32.mrf.mxu0
        %1422 = vdwg.mxu0
        %v1423 = vadd.f32 %v1238, %v1418
        %v1424 = vld [vmem:[%s14] sm:$0x1]
        %v1425 = vld [vmem:[%s15] sm:$0x1]
        %v1426 = vsel %vm569, %v1423, 0.0
        %1427 = vadd.xlane.f32.xlu0 %v1426
        %v1428 = vpop.xlane.xlu0 %1427
        %v1429 = vmul.f32 %v1428, %v1214
        %v1430 = vsub.f32 %v1423, %v1429
        %v1431 = vmul.f32 %v1430, %v1430
        %v1432 = vsel %vm569, %v1431, 0.0
        %1433 = vadd.xlane.f32.xlu0 %v1432
        %v1434 = vpop.xlane.xlu0 %1433
        %v1435 = vmul.f32 %v1434, %v1214
        %v1436 = vadd.f32 %v1435, 1e-05
        %v1437 = vrsqrt.pop %v1436
        %v1438 = vmul.f32 %v1430, %v1437
        %v1440 = vlaneseq
        %v1441 = vshrl.u32 %v1440, 7
        %v1442 = vsub.s32 0, %v1441
        %v1443 = vrot.slane %v1424, %v1442
        %v1445 = vmul.f32 %v1438, %v1443
        %v1447 = vlaneseq
        %v1448 = vshrl.u32 %v1447, 7
        %v1449 = vsub.s32 0, %v1448
        %v1450 = vrot.slane %v1425, %v1449
        %v1452 = vadd.f32 %v1445, %v1450
        %1453 = vst.msk [vmem:[%s527] sm:$0xff] %vm569, %v1452
        %s1454 = sand.u32 %s384, 1
        %s1455 = scalar_lea.sflag [#allocation3], %s1454
        %s1456 = sand.u32 %s384, 1
        %s1457 = smul.addr %s1456, 8
        %s1458 = scalar_lea.vmem [#allocation2], %s1457
        // Predicated region
        $region85: #{tpu_custom_call.1} parent=83 // pred_check
          %p1459 = pneg %p394
        $region86: #{tpu_custom_call.1} parent=83 // pred_check_branch
          %1461 = sbr.rel (%p1459) target = $region88
        $region87: #{tpu_custom_call.1} parent=83 // pred_region
          %s1463 = ssub.s32 128, 128
          %1464 = vsyncadd %s1455, %s1463
          %s1465 = smul.addr %s30, 128
          %s1466 = scalar_lea.hbm %s16, %s1465
          %s1468 = sshll.u32 %s1458, 4
          %s1469 = int_to_ptr.vmem [resolvable:$true] %s1468
          %1471 = dma.vmem_to_hbm [thread:$0]  %s1469, 128, %s1466, %s1455
        $region88: #{tpu_custom_call.1} parent=83 // pred_fallthru
          _
      $region84: #{tpu_custom_call.1} parent=5 // pred_fallthru
        _
      %p1472 = scmp.le.s32.totalorder 2, %s25
      // Predicated region
      $region89: #{tpu_custom_call.1} parent=5 // pred_check
        %p1473 = pneg %p1472
      $region90: #{tpu_custom_call.1} parent=5 // pred_check_branch
        %1475 = sbr.rel (%p1473) target = $region92
      $region91: #{tpu_custom_call.1} parent=5 // pred_region
        %s1476 = ssub.s32 %s25, 2
        // Predicated region
        $region93: #{tpu_custom_call.1} parent=91 // pred_check
          %p1477 = pneg %p400
        $region94: #{tpu_custom_call.1} parent=91 // pred_check_branch
          %1479 = sbr.rel (%p1477) target = $region96
        $region95: #{tpu_custom_call.1} parent=91 // pred_region
          %s1480 = sand.u32 %s385, 1
          %s1481 = scalar_lea.sflag [#allocation3], %s1480
          %s1482 = sand.u32 %s385, 1
          %s1483 = smul.addr %s1482, 8
          %s1484 = scalar_lea.vmem [#allocation2], %s1483
          %1485 = dma.done %s1481, 128
        $region96: #{tpu_custom_call.1} parent=91 // pred_fallthru
          _
      $region92: #{tpu_custom_call.1} parent=5 // pred_fallthru
        _
    $region6: #{tpu_custom_call.1} parent=1 // loop_footer
      %s29 = sadd.s32 1, %s25
    $region7: #{tpu_custom_call.1} parent=1 // loop_footer_branch
      %24 = sbr.rel target = $region3
    $region8: #{tpu_custom_call.1} parent=1 // loop_exit
      _
    %1486 = vsyncpa [#allocation3], 1
    %s1487 = scalar_lea.sflag [#allocation3], 1
    %1488 = vsyncpa %s1487, 1

</llo_original>
